<compile_context>
chip_gen: v7x
topology: tpu7x:2x2x1
jax: 0.10.0
libtpu: 0.0.40
codegen_flags: <defaults>
</compile_context>

<pallas_src>
import functools

import jax
import jax.numpy as jnp
from jax import lax
from jax.experimental import pallas as pl
from jax.experimental.pallas import tpu as pltpu


def _round_up(x, m):
    return (x + m - 1) // m * m


def _make_dnn_kernel(batch, action_dim, a_pad, tile_b, single_tile):
    """Builds the kernel body, specialized on static shapes / tile layout."""
    inv_count = 1.0 / float(batch * action_dim)

    def kernel(x_ref,
               w1_ref, b1_ref,
               w2_ref, b2_ref,
               wav_ref, bav_ref,
               wa2_ref, ba2_ref,
               wv2_ref, bv2_ref,
               q_ref):
        bf16 = jnp.bfloat16
        f32 = jnp.float32

        x = x_ref[...].astype(bf16)                                   # (TB, S)

        # --- shared trunk: MXU (bf16 operands, f32 accumulate); bias-add/relu in
        #     bf16 so the widest live tensors use half the vregs and feed the next
        #     dot with no extra cast.
        h1 = jnp.maximum(
            jnp.dot(x, w1_ref[...], preferred_element_type=f32).astype(bf16)
            + b1_ref[...], 0)                                         # (TB, 512) bf16
        h2 = jnp.maximum(
            jnp.dot(h1, w2_ref[...], preferred_element_type=f32).astype(bf16)
            + b2_ref[...], 0)                                         # (TB, 256) bf16

        # --- fused adv1 | val1 matmul: (TB,256) @ (256, 256+128), lane-aligned slices
        av = jnp.maximum(
            jnp.dot(h2, wav_ref[...], preferred_element_type=f32).astype(bf16)
            + bav_ref[...], 0)                                        # (TB, 384) bf16
        adv_h = av[:, :256]                                           # (TB, 256)
        val_h = av[:, 256:]                                           # (TB, 128)

        # --- advantage head; padded columns (weight=0, bias=0) give relu(0)=0
        adv = jnp.maximum(
            jnp.dot(adv_h, wa2_ref[...], preferred_element_type=f32)
            + ba2_ref[...], 0.0)                                      # (TB, A_pad) f32

        # --- value head (out dim 1): VPU multiply + XLU cross-lane sum, no MXU pass
        val = jnp.maximum(
            jnp.sum(val_h.astype(f32) * wv2_ref[...], axis=-1, keepdims=True)
            + bv2_ref[...], 0.0)                                      # (TB, 1) f32

        if single_tile:
            # Whole batch lives in this tile: finish the dueling combine in-kernel.
            # Padded batch rows are excluded from the scalar mean via the row mask.
            row = lax.broadcasted_iota(jnp.int32, (tile_b, 1), 0)
            adv_sum = jnp.sum(jnp.where(row < batch, adv, 0.0))
            q_ref[...] = val + (adv - adv_sum * inv_count)
        else:
            # Multi-tile: store q_pre = val + adv, and stash the per-row adv sum in
            # the last padded (always-zero) lane -> a single lane-dense output, no
            # masked (TB,1) store and no second DMA stream.  The global mean is
            # finished in a tiny JAX epilogue outside.
            rowsum = jnp.sum(adv, axis=-1, keepdims=True)             # padded cols are 0
            col = lax.broadcasted_iota(jnp.int32, (tile_b, a_pad), 1)
            q_ref[...] = jnp.where(col == a_pad - 1, rowsum, val + adv)

    return kernel


def pack_params(params, weight_dtype=jnp.bfloat16):
    """One-time (outside the hot path) fuse / pad / cast of the parameters.

    Input dict holds (in, out)-layout weights and (1, out) biases in float32:
      w1 (S,512) b1 | w2 (512,256) b2 | wa1 (256,256) ba1 |
      wa2 (256,A) ba2 | wv1 (256,128) bv1 | wv2 (128,1) bv2
    """
    A = params["wa2"].shape[1]
    # Always leave >= 1 zero "spare" lane after the real action columns: the
    # multi-tile path stashes the per-row adv sum there so the kernel only has a
    # single lane-dense output.
    A_pad = _round_up(A + 1, 128)

    w_av = jnp.concatenate([params["wa1"], params["wv1"]], axis=1)       # (256, 384)
    b_av = jnp.concatenate([params["ba1"], params["bv1"]], axis=1)       # (1, 384)
    wa2p = jnp.pad(params["wa2"], ((0, 0), (0, A_pad - A)))              # (256, A_pad)
    ba2p = jnp.pad(params["ba2"], ((0, 0), (0, A_pad - A)))              # (1, A_pad)
    wv2row = params["wv2"].T                                             # (1, 128)

    wdt = weight_dtype
    return {
        # wide layers: weights AND biases in bf16 (bias-add/relu done in bf16)
        "w1": params["w1"].astype(wdt), "b1": params["b1"].astype(wdt),
        "w2": params["w2"].astype(wdt), "b2": params["b2"].astype(wdt),
        "w_av": w_av.astype(wdt), "b_av": b_av.astype(wdt),
        # final heads stay f32 on the bias / output side
        "wa2": wa2p.astype(wdt), "ba2": ba2p.astype(jnp.float32),
        "wv2row": wv2row.astype(jnp.float32),
        "bv2": params["bv2"].astype(jnp.float32),
    }


def dnn_forward(state, packed, action_dim, *, max_tile=1024, batch_core_parallel=False):
    """state: (B, state_dim) f32; packed: pack_params output; returns (B, action_dim) f32.

    max_tile: largest batch-tile processed per grid step.  Any batch up to this
      size runs as a single tile (dueling mean fully in-kernel, no epilogue).
    batch_core_parallel: set True on multi-TensorCore chips (v7x) for large
      batches so the batch grid axis is split across cores (CORE_PARALLEL);
      opt-in because single-TC chips (v5e/v6e) gain nothing from it.
    """
    B, S = state.shape
    A = action_dim
    A_pad = packed["wa2"].shape[1]

    # Rough live-VMEM bytes per batch row (double-buffered streamed tiles +
    # bf16/f32 intermediates): keeps the tile well inside the 32 MiB limit below
    # even for unusually large state_dim.
    per_row = 8 * (S + A_pad) + 2 * (512 + 256 + 384) + 4 * A_pad + 4 * 512
    budget_rows = max(128, ((16 * 1024 * 1024) // per_row) // 8 * 8)
    tile_cap = max(8, (min(max_tile, budget_rows) // 8) * 8)

    if B <= tile_cap:
        TB = _round_up(max(B, 1), 8)           # single tile: whole batch at once
    else:
        TB = tile_cap
    B_pad = _round_up(B, TB)
    n_tiles = B_pad // TB
    single_tile = (n_tiles == 1)

    if B_pad != B:
        state = jnp.pad(state, ((0, B_pad - B), (0, 0)))

    kernel = _make_dnn_kernel(B, A, A_pad, TB, single_tile)

    def w_spec(arr):
        return pl.BlockSpec(arr.shape, lambda i: (0, 0))   # resident across the grid

    in_specs = [
        pl.BlockSpec((TB, S), lambda i: (i, 0)),            # only state streams per tile
        w_spec(packed["w1"]), w_spec(packed["b1"]),
        w_spec(packed["w2"]), w_spec(packed["b2"]),
        w_spec(packed["w_av"]), w_spec(packed["b_av"]),
        w_spec(packed["wa2"]), w_spec(packed["ba2"]),
        w_spec(packed["wv2row"]), w_spec(packed["bv2"]),
    ]
    out_specs = pl.BlockSpec((TB, A_pad), lambda i: (i, 0))  # single lane-dense output
    out_shape = jax.ShapeDtypeStruct((B_pad, A_pad), jnp.float32)

    if single_tile:
        sem = ("arbitrary",)
    elif batch_core_parallel:
        sem = (pltpu.CORE_PARALLEL,)           # split batch tiles across TCs (v7x)
    else:
        sem = ("parallel",)

    q_pre = pl.pallas_call(
        kernel,
        grid=(n_tiles,),
        in_specs=in_specs,
        out_specs=out_specs,
        out_shape=out_shape,
        compiler_params=pltpu.CompilerParams(
            dimension_semantics=sem,
            vmem_limit_bytes=32 * 1024 * 1024),   # v5e scoped default is only 16 MiB
    )(state,
      packed["w1"], packed["b1"],
      packed["w2"], packed["b2"],
      packed["w_av"], packed["b_av"],
      packed["wa2"], packed["ba2"],
      packed["wv2row"], packed["bv2"])

    if single_tile:
        return q_pre[:B, :A]
    # Epilogue (only for B > tile_cap): per-row adv sums live in the last padded
    # lane; finish the global scalar mean and subtract it from the real columns.
    adv_mean = jnp.sum(q_pre[:B, A_pad - 1]) / (B * A)
    return q_pre[:B, :A] - adv_mean


def init_params(key, state_dim, action_dim):
    """Deterministic synthetic init (same layer shapes as the torch module).
    Weights stored as (in, out) = W^T, biases as (1, out)."""
    dims = [
        ("w1", "b1", state_dim, 512),
        ("w2", "b2", 512, 256),
        ("wa1", "ba1", 256, 256),
        ("wa2", "ba2", 256, action_dim),
        ("wv1", "bv1", 256, 128),
        ("wv2", "bv2", 128, 1),
    ]
    params = {}
    for wname, bname, din, dout in dims:
        key, kw, kb = jax.random.split(key, 3)
        params[wname] = jax.random.uniform(
            kw, (din, dout), jnp.float32, minval=-0.1, maxval=0.1)
        params[bname] = jax.random.uniform(
            kb, (1, dout), jnp.float32, minval=-0.1, maxval=0.1)
    return params


def dnn_reference_f32(state, params):
    """Pure-f32 reference mirroring the torch forward exactly."""
    r = jax.nn.relu
    h1 = r(state @ params["w1"] + params["b1"])
    h2 = r(h1 @ params["w2"] + params["b2"])
    adv = r(h2 @ params["wa1"] + params["ba1"])
    adv = r(adv @ params["wa2"] + params["ba2"])
    val = r(h2 @ params["wv1"] + params["bv1"])
    val = r(val @ params["wv2"] + params["bv2"])
    return val + (adv - jnp.mean(adv))


def dnn_reference_matched(state, params):
    """Reference mirroring the kernel numerics (bf16 matmuls; bf16 bias-add/relu on
    the wide intermediates; f32 heads and dueling combine)."""
    r = jax.nn.relu
    bf16, f32 = jnp.bfloat16, jnp.float32

    def mm(a, w):
        return jnp.dot(a.astype(bf16), w.astype(bf16), preferred_element_type=f32)

    def layer_bf16(a, w, b):
        return r(mm(a, w).astype(bf16) + b.astype(bf16))

    h1 = layer_bf16(state, params["w1"], params["b1"])
    h2 = layer_bf16(h1, params["w2"], params["b2"])
    adv_h = layer_bf16(h2, params["wa1"], params["ba1"])
    val_h = layer_bf16(h2, params["wv1"], params["bv1"])
    adv = r(mm(adv_h, params["wa2"]) + params["ba2"])
    val = r(jnp.sum(val_h.astype(f32) * params["wv2"][:, 0][None, :],
                    axis=-1, keepdims=True) + params["bv2"])
    return val + (adv - jnp.mean(adv))


if __name__ == "__main__":
    key = jax.random.PRNGKey(0)
    k_param, k_state, k_state2 = jax.random.split(key, 3)

    batch = 8
    state_dim = 32
    action_dim = 16

    params = init_params(k_param, state_dim, action_dim)
    packed = pack_params(params)

    fwd = jax.jit(functools.partial(dnn_forward, action_dim=action_dim))

    # --- small batch: single-tile path (dueling combine fully in-kernel) ---
    state = jax.random.normal(k_state, (batch, state_dim), jnp.float32)
    q = jax.block_until_ready(fwd(state, packed))
    q_match = dnn_reference_matched(state, params)
    q_f32 = dnn_reference_f32(state, params)
    assert q.shape == (batch, action_dim)
    assert jnp.allclose(q, q_match, atol=2e-3, rtol=2e-3), "mismatch vs matched reference (B=8)"
    assert jnp.allclose(q, q_f32, atol=8e-2, rtol=8e-2), "drifted too far from f32 reference (B=8)"

    # --- larger batch: still single-tile now that the cap is 1024 (no epilogue) ---
    batch2 = 384
    state2 = jax.random.normal(k_state2, (batch2, state_dim), jnp.float32)
    q2 = jax.block_until_ready(fwd(state2, packed))
    q2_match = dnn_reference_matched(state2, params)
    q2_f32 = dnn_reference_f32(state2, params)
    assert q2.shape == (batch2, action_dim)
    assert jnp.allclose(q2, q2_match, atol=2e-3, rtol=2e-3), "mismatch vs matched reference (B=384)"
    assert jnp.allclose(q2, q2_f32, atol=8e-2, rtol=8e-2), "drifted too far from f32 reference (B=384)"

    # --- force the multi-tile + epilogue path (what batches > 1024 would take) ---
    fwd_mt = jax.jit(functools.partial(dnn_forward, action_dim=action_dim, max_tile=128))
    q3 = jax.block_until_ready(fwd_mt(state2, packed))
    assert q3.shape == (batch2, action_dim)
    assert jnp.allclose(q3, q2_match, atol=2e-3, rtol=2e-3), "mismatch vs matched reference (multi-tile)"
    assert jnp.allclose(q3, q2, atol=1e-4, rtol=1e-4), "single-tile vs multi-tile disagreement"

    print("KERNEL_OK")
</pallas_src>

<mosaic_0001>
module attributes {stable_mosaic.version = 11 : i64} {
  func.func @kernel(%arg0: i32, %arg1: memref<8x32xf32, #tpu.memory_space<vmem>>, %arg2: memref<32x512xbf16, #tpu.memory_space<vmem>>, %arg3: memref<1x512xbf16, #tpu.memory_space<vmem>>, %arg4: memref<512x256xbf16, #tpu.memory_space<vmem>>, %arg5: memref<1x256xbf16, #tpu.memory_space<vmem>>, %arg6: memref<256x384xbf16, #tpu.memory_space<vmem>>, %arg7: memref<1x384xbf16, #tpu.memory_space<vmem>>, %arg8: memref<256x128xbf16, #tpu.memory_space<vmem>>, %arg9: memref<1x128xf32, #tpu.memory_space<vmem>>, %arg10: memref<1x128xf32, #tpu.memory_space<vmem>>, %arg11: memref<1x1xf32, #tpu.memory_space<vmem>>, %arg12: memref<8x128xf32, #tpu.memory_space<vmem>>) attributes {dimension_semantics = [#tpu.dimension_semantics<arbitrary>], iteration_bounds = array<i64: 1>, scalar_prefetch = 0 : i64, scratch_operands = 0 : i64, tpu.core_type = #tpu.core_type<tc>, window_params = [{transform_indices = @transform_0, window_bounds = array<i64: 8, 32>}, {pipeline_mode = #tpu.pipeline_mode<synchronous>, transform_indices = @transform_1, window_bounds = array<i64: 32, 512>}, {pipeline_mode = #tpu.pipeline_mode<synchronous>, transform_indices = @transform_2, window_bounds = array<i64: 1, 512>}, {pipeline_mode = #tpu.pipeline_mode<synchronous>, transform_indices = @transform_3, window_bounds = array<i64: 512, 256>}, {pipeline_mode = #tpu.pipeline_mode<synchronous>, transform_indices = @transform_4, window_bounds = array<i64: 1, 256>}, {pipeline_mode = #tpu.pipeline_mode<synchronous>, transform_indices = @transform_5, window_bounds = array<i64: 256, 384>}, {pipeline_mode = #tpu.pipeline_mode<synchronous>, transform_indices = @transform_6, window_bounds = array<i64: 1, 384>}, {pipeline_mode = #tpu.pipeline_mode<synchronous>, transform_indices = @transform_7, window_bounds = array<i64: 256, 128>}, {pipeline_mode = #tpu.pipeline_mode<synchronous>, transform_indices = @transform_8, window_bounds = array<i64: 1, 128>}, {pipeline_mode = #tpu.pipeline_mode<synchronous>, transform_indices = @transform_9, window_bounds = array<i64: 1, 128>}, {pipeline_mode = #tpu.pipeline_mode<synchronous>, transform_indices = @transform_10, window_bounds = array<i64: 1, 1>}, {transform_indices = @transform_11, window_bounds = array<i64: 8, 128>}]} {
    %c0 = arith.constant 0 : index
    %c0_0 = arith.constant 0 : index
    %0 = vector.load %arg1[%c0, %c0_0] : memref<8x32xf32, #tpu.memory_space<vmem>>, vector<8x32xf32>
    %1 = arith.truncf %0 : vector<8x32xf32> to vector<8x32xbf16>
    %c0_1 = arith.constant 0 : index
    %c0_2 = arith.constant 0 : index
    %2 = vector.load %arg2[%c0_1, %c0_2] : memref<32x512xbf16, #tpu.memory_space<vmem>>, vector<32x512xbf16>
    %cst = arith.constant dense<0.000000e+00> : vector<8x512xf32>
    %3 = tpu.matmul %1, %2, %cst {dimension_numbers = #tpu.dot_dimension_numbers<[1], [0], [0], [1], [0, 0, 1, 1], [], []>} : vector<8x32xbf16>, vector<32x512xbf16>, vector<8x512xf32> -> vector<8x512xf32>
    %4 = arith.truncf %3 : vector<8x512xf32> to vector<8x512xbf16>
    %c0_3 = arith.constant 0 : index
    %c0_4 = arith.constant 0 : index
    %5 = vector.load %arg3[%c0_3, %c0_4] : memref<1x512xbf16, #tpu.memory_space<vmem>>, vector<1x512xbf16>
    %6 = vector.broadcast %5 : vector<1x512xbf16> to vector<8x512xbf16>
    %7 = arith.addf %4, %6 : vector<8x512xbf16>
    %cst_5 = arith.constant 0.000000e+00 : bf16
    %8 = vector.broadcast %cst_5 : bf16 to vector<8x512xbf16>
    %9 = arith.maximumf %7, %8 : vector<8x512xbf16>
    %c0_6 = arith.constant 0 : index
    %c0_7 = arith.constant 0 : index
    %10 = vector.load %arg4[%c0_6, %c0_7] : memref<512x256xbf16, #tpu.memory_space<vmem>>, vector<512x256xbf16>
    %cst_8 = arith.constant dense<0.000000e+00> : vector<8x256xf32>
    %11 = tpu.matmul %9, %10, %cst_8 {dimension_numbers = #tpu.dot_dimension_numbers<[1], [0], [0], [1], [0, 0, 1, 1], [], []>} : vector<8x512xbf16>, vector<512x256xbf16>, vector<8x256xf32> -> vector<8x256xf32>
    %12 = arith.truncf %11 : vector<8x256xf32> to vector<8x256xbf16>
    %c0_9 = arith.constant 0 : index
    %c0_10 = arith.constant 0 : index
    %13 = vector.load %arg5[%c0_9, %c0_10] : memref<1x256xbf16, #tpu.memory_space<vmem>>, vector<1x256xbf16>
    %14 = vector.broadcast %13 : vector<1x256xbf16> to vector<8x256xbf16>
    %15 = arith.addf %12, %14 : vector<8x256xbf16>
    %cst_11 = arith.constant 0.000000e+00 : bf16
    %16 = vector.broadcast %cst_11 : bf16 to vector<8x256xbf16>
    %17 = arith.maximumf %15, %16 : vector<8x256xbf16>
    %c0_12 = arith.constant 0 : index
    %c0_13 = arith.constant 0 : index
    %18 = vector.load %arg6[%c0_12, %c0_13] : memref<256x384xbf16, #tpu.memory_space<vmem>>, vector<256x384xbf16>
    %cst_14 = arith.constant dense<0.000000e+00> : vector<8x384xf32>
    %19 = tpu.matmul %17, %18, %cst_14 {dimension_numbers = #tpu.dot_dimension_numbers<[1], [0], [0], [1], [0, 0, 1, 1], [], []>} : vector<8x256xbf16>, vector<256x384xbf16>, vector<8x384xf32> -> vector<8x384xf32>
    %20 = arith.truncf %19 : vector<8x384xf32> to vector<8x384xbf16>
    %c0_15 = arith.constant 0 : index
    %c0_16 = arith.constant 0 : index
    %21 = vector.load %arg7[%c0_15, %c0_16] : memref<1x384xbf16, #tpu.memory_space<vmem>>, vector<1x384xbf16>
    %22 = vector.broadcast %21 : vector<1x384xbf16> to vector<8x384xbf16>
    %23 = arith.addf %20, %22 : vector<8x384xbf16>
    %cst_17 = arith.constant 0.000000e+00 : bf16
    %24 = vector.broadcast %cst_17 : bf16 to vector<8x384xbf16>
    %25 = arith.maximumf %23, %24 : vector<8x384xbf16>
    %26 = vector.extract_strided_slice %25 {offsets = [0, 0], sizes = [8, 256], strides = [1, 1]} : vector<8x384xbf16> to vector<8x256xbf16>
    %27 = vector.extract_strided_slice %25 {offsets = [0, 256], sizes = [8, 128], strides = [1, 1]} : vector<8x384xbf16> to vector<8x128xbf16>
    %c0_18 = arith.constant 0 : index
    %c0_19 = arith.constant 0 : index
    %28 = vector.load %arg8[%c0_18, %c0_19] : memref<256x128xbf16, #tpu.memory_space<vmem>>, vector<256x128xbf16>
    %cst_20 = arith.constant dense<0.000000e+00> : vector<8x128xf32>
    %29 = tpu.matmul %26, %28, %cst_20 {dimension_numbers = #tpu.dot_dimension_numbers<[1], [0], [0], [1], [0, 0, 1, 1], [], []>} : vector<8x256xbf16>, vector<256x128xbf16>, vector<8x128xf32> -> vector<8x128xf32>
    %c0_21 = arith.constant 0 : index
    %c0_22 = arith.constant 0 : index
    %30 = vector.load %arg9[%c0_21, %c0_22] : memref<1x128xf32, #tpu.memory_space<vmem>>, vector<1x128xf32>
    %31 = vector.broadcast %30 : vector<1x128xf32> to vector<8x128xf32>
    %32 = arith.addf %29, %31 : vector<8x128xf32>
    %cst_23 = arith.constant 0.000000e+00 : f32
    %33 = vector.broadcast %cst_23 : f32 to vector<8x128xf32>
    %34 = arith.maximumf %32, %33 : vector<8x128xf32>
    %35 = arith.extf %27 : vector<8x128xbf16> to vector<8x128xf32>
    %c0_24 = arith.constant 0 : index
    %c0_25 = arith.constant 0 : index
    %36 = vector.load %arg10[%c0_24, %c0_25] : memref<1x128xf32, #tpu.memory_space<vmem>>, vector<1x128xf32>
    %37 = vector.broadcast %36 : vector<1x128xf32> to vector<8x128xf32>
    %38 = arith.mulf %35, %37 : vector<8x128xf32>
    %cst_26 = arith.constant dense<0.000000e+00> : vector<8xf32>
    %39 = vector.multi_reduction <add>, %38, %cst_26 [1] : vector<8x128xf32> to vector<8xf32>
    %40 = vector.shape_cast %39 : vector<8xf32> to vector<8x1xf32>
    %c0_27 = arith.constant 0 : index
    %c0_28 = arith.constant 0 : index
    %41 = vector.load %arg11[%c0_27, %c0_28] : memref<1x1xf32, #tpu.memory_space<vmem>>, vector<1x1xf32>
    %42 = vector.broadcast %41 : vector<1x1xf32> to vector<8x1xf32>
    %43 = arith.addf %40, %42 : vector<8x1xf32>
    %cst_29 = arith.constant 0.000000e+00 : f32
    %44 = vector.broadcast %cst_29 : f32 to vector<8x1xf32>
    %45 = arith.maximumf %43, %44 : vector<8x1xf32>
    %46 = tpu.iota {dimensions = array<i32: 0>} : vector<8x1xi32>
    %c8_i32 = arith.constant 8 : i32
    %47 = vector.broadcast %c8_i32 : i32 to vector<8x1xi32>
    %48 = arith.cmpi slt, %46, %47 : vector<8x1xi32>
    %cst_30 = arith.constant 0.000000e+00 : f32
    %49 = vector.shape_cast %48 : vector<8x1xi1> to vector<8x1xi1>
    %50 = vector.broadcast %49 : vector<8x1xi1> to vector<8x128xi1>
    %51 = vector.broadcast %cst_30 : f32 to vector<8x128xf32>
    %52 = arith.select %50, %34, %51 : vector<8x128xi1>, vector<8x128xf32>
    %53 = vector.shape_cast %52 : vector<8x128xf32> to vector<1x8x128xf32>
    %cst_31 = arith.constant dense<0.000000e+00> : vector<1xf32>
    %54 = vector.multi_reduction <add>, %53, %cst_31 [1, 2] : vector<1x8x128xf32> to vector<1xf32>
    %55 = vector.shape_cast %54 : vector<1xf32> to vector<1x1x1xf32>
    %56 = vector.extract %55[0, 0, 0] : f32 from vector<1x1x1xf32>
    %cst_32 = arith.constant 7.812500e-03 : f32
    %57 = arith.mulf %56, %cst_32 : f32
    %58 = vector.broadcast %57 : f32 to vector<8x128xf32>
    %59 = arith.subf %34, %58 : vector<8x128xf32>
    %60 = vector.broadcast %45 : vector<8x1xf32> to vector<8x128xf32>
    %61 = arith.addf %60, %59 : vector<8x128xf32>
    %c0_33 = arith.constant 0 : index
    %c0_34 = arith.constant 0 : index
    %62 = vector.load %arg12[%c0_33, %c0_34] : memref<8x128xf32, #tpu.memory_space<vmem>>, vector<8x128xf32>
    tpu.vector_store %arg12[%c0_33, %c0_34], %61 {strides = array<i32>} : memref<8x128xf32, #tpu.memory_space<vmem>>, vector<8x128xf32>,
    return
  }
  func.func @transform_0(%arg0: i32) -> (i32, i32) {
    %c0_i32 = arith.constant 0 : i32
    %c0_i32_0 = arith.constant 0 : i32
    return %arg0, %c0_i32 : i32, i32
  }
  func.func @transform_1(%arg0: i32) -> (i32, i32) {
    %c0_i32 = arith.constant 0 : i32
    %c0_i32_0 = arith.constant 0 : i32
    %c0_i32_1 = arith.constant 0 : i32
    return %c0_i32, %c0_i32_0 : i32, i32
  }
  func.func @transform_2(%arg0: i32) -> (i32, i32) {
    %c0_i32 = arith.constant 0 : i32
    %c0_i32_0 = arith.constant 0 : i32
    %c0_i32_1 = arith.constant 0 : i32
    return %c0_i32, %c0_i32_0 : i32, i32
  }
  func.func @transform_3(%arg0: i32) -> (i32, i32) {
    %c0_i32 = arith.constant 0 : i32
    %c0_i32_0 = arith.constant 0 : i32
    %c0_i32_1 = arith.constant 0 : i32
    return %c0_i32, %c0_i32_0 : i32, i32
  }
  func.func @transform_4(%arg0: i32) -> (i32, i32) {
    %c0_i32 = arith.constant 0 : i32
    %c0_i32_0 = arith.constant 0 : i32
    %c0_i32_1 = arith.constant 0 : i32
    return %c0_i32, %c0_i32_0 : i32, i32
  }
  func.func @transform_5(%arg0: i32) -> (i32, i32) {
    %c0_i32 = arith.constant 0 : i32
    %c0_i32_0 = arith.constant 0 : i32
    %c0_i32_1 = arith.constant 0 : i32
    return %c0_i32, %c0_i32_0 : i32, i32
  }
  func.func @transform_6(%arg0: i32) -> (i32, i32) {
    %c0_i32 = arith.constant 0 : i32
    %c0_i32_0 = arith.constant 0 : i32
    %c0_i32_1 = arith.constant 0 : i32
    return %c0_i32, %c0_i32_0 : i32, i32
  }
  func.func @transform_7(%arg0: i32) -> (i32, i32) {
    %c0_i32 = arith.constant 0 : i32
    %c0_i32_0 = arith.constant 0 : i32
    %c0_i32_1 = arith.constant 0 : i32
    return %c0_i32, %c0_i32_0 : i32, i32
  }
  func.func @transform_8(%arg0: i32) -> (i32, i32) {
    %c0_i32 = arith.constant 0 : i32
    %c0_i32_0 = arith.constant 0 : i32
    %c0_i32_1 = arith.constant 0 : i32
    return %c0_i32, %c0_i32_0 : i32, i32
  }
  func.func @transform_9(%arg0: i32) -> (i32, i32) {
    %c0_i32 = arith.constant 0 : i32
    %c0_i32_0 = arith.constant 0 : i32
    %c0_i32_1 = arith.constant 0 : i32
    return %c0_i32, %c0_i32_0 : i32, i32
  }
  func.func @transform_10(%arg0: i32) -> (i32, i32) {
    %c0_i32 = arith.constant 0 : i32
    %c0_i32_0 = arith.constant 0 : i32
    %c0_i32_1 = arith.constant 0 : i32
    return %c0_i32, %c0_i32_0 : i32, i32
  }
  func.func @transform_11(%arg0: i32) -> (i32, i32) {
    %c0_i32 = arith.constant 0 : i32
    %c0_i32_0 = arith.constant 0 : i32
    return %arg0, %c0_i32 : i32, i32
  }
}

</mosaic_0001>

<llo_original>
// kernel: dnn_forward.1
$region0: #{dnn_forward.1}
  #allocation0 [shape = 'u32[]', space=smem, size = 0x4, offset = 0x4, fixed_abs, tag = 'smem constant byte address 0x4 - core index']
  #allocation1 [shape = 'u32[144,128]{1,0:T(1,128)}', space=vmem, size = 0x12000, scoped, tag = 'internal scratch']
  #allocation2 [shape = 'f32[1,1]{1,0:T(1,128)S(1)}', space=vmem, size = 0x200, scoped, tag = 'scoped memory for dnn_forward.1']
  %s0 = inlined_call_operand.hbm [shape: f32[8,32], index: 0, kind: input, shape index: {}]
  %s1 = inlined_call_operand.hbm [shape: bf16[32,512], index: 1, kind: input, shape index: {}]
  %s2 = inlined_call_operand.vmem [shape: bf16[1,512], index: 2, kind: input, shape index: {}]
  %s3 = inlined_call_operand.hbm [shape: bf16[512,256], index: 3, kind: input, shape index: {}]
  %s4 = inlined_call_operand.vmem [shape: bf16[1,256], index: 4, kind: input, shape index: {}]
  %s5 = inlined_call_operand.hbm [shape: bf16[256,384], index: 5, kind: input, shape index: {}]
  %s6 = inlined_call_operand.vmem [shape: bf16[1,384], index: 6, kind: input, shape index: {}]
  %s7 = inlined_call_operand.hbm [shape: bf16[256,128], index: 7, kind: input, shape index: {}]
  %s8 = inlined_call_operand.vmem [shape: f32[1,128], index: 8, kind: input, shape index: {}]
  %s9 = inlined_call_operand.vmem [shape: f32[1,128], index: 9, kind: input, shape index: {}]
  %s10 = inlined_call_operand.<no memory space> [shape: f32[1,1], index: 10, kind: input, shape index: {}]
  %s11 = inlined_call_operand.hbm [shape: f32[8,128], index: 11, kind: output, shape index: {}]
  %s12 = sld [smem:[#allocation0]]
  $region74: #{dnn_forward.1} parent=0
    _
  %s14 = ssub.s32 1, %s12
  %s15 = scalar_select 0, %s14, %s12
  %v16 = vstv %s10
  %17 = vst [vmem:[#allocation2] sm:$0x1] %v16
  $region1: #{dnn_forward.1} parent=0
    #allocation3 [shape = 'u8[4096]{0}', space=vmem, size = 0x1000, scoped, tag = 'input window, operand 0, single buffered']
    #allocation4 [shape = 's32[1]{0}', space=sflag, size = 0x4, scoped, tag = 'scoped memory for dnn_forward.1']
    #allocation5 [shape = 's32[1]{0}', space=sflag, size = 0x4, scoped, tag = 'scoped memory for dnn_forward.1']
    #allocation6 [shape = 'u8[32768]{0}', space=vmem, size = 0x8000, scoped, tag = 'input window, operand 1, single buffered']
    #allocation7 [shape = 's32[1]{0}', space=sflag, size = 0x4, scoped, tag = 'scoped memory for dnn_forward.1']
    #allocation8 [shape = 'u8[262144]{0}', space=vmem, size = 0x40000, scoped, tag = 'input window, operand 3, single buffered']
    #allocation9 [shape = 'u8[196608]{0}', space=vmem, size = 0x30000, scoped, tag = 'input window, operand 5, single buffered']
    #allocation10 [shape = 's32[1]{0}', space=sflag, size = 0x4, scoped, tag = 'scoped memory for dnn_forward.1']
    #allocation11 [shape = 'u8[65536]{0}', space=vmem, size = 0x10000, scoped, tag = 'input window, operand 7, single buffered']
    #allocation12 [shape = 'u8[4096]{0}', space=vmem, size = 0x1000, scoped, tag = 'output window, operand 0, single buffered']
    %18 = vsyncpa [#allocation4], 0
    %19 = vsyncpa [#allocation7], 0
    %20 = vsyncpa [#allocation10], 0
    %21 = vsyncpa [#allocation5], 0
    // Predicated region
    $region2: #{dnn_forward.1} parent=1 // pred_check
      _
    $region3: #{dnn_forward.1} parent=1 // pred_check_branch
      %23 = sbr.rel (0) target = $region5
    $region4: #{dnn_forward.1} parent=1 // pred_region
      %s25 = ssub.s32 128, 128
      %26 = vsyncadd [#allocation4], %s25
      %s28 = sshll.u32 [#allocation3], 4
      %s29 = int_to_ptr.vmem [resolvable:$true] %s28
      %31 = dma.hbm_to_vmem [thread:$0]  %s0, 128, %s29, [#allocation4]
    $region5: #{dnn_forward.1} parent=1 // pred_fallthru
      _
    // Predicated region
    $region6: #{dnn_forward.1} parent=1 // pred_check
      _
    $region7: #{dnn_forward.1} parent=1 // pred_check_branch
      %33 = sbr.rel (0) target = $region9
    $region8: #{dnn_forward.1} parent=1 // pred_region
      %s35 = ssub.s32 1024, 1024
      %36 = vsyncadd [#allocation7], %s35
      %s37 = sshll.u32 [#allocation6], 4
      %s38 = int_to_ptr.vmem [resolvable:$true] %s37
      %43 = dma.hbm_to_vmem [thread:$0]  %s1, 1024, %s38, [#allocation7], 256, 256, 16
    $region9: #{dnn_forward.1} parent=1 // pred_fallthru
      _
    // Predicated region
    $region10: #{dnn_forward.1} parent=1 // pred_check
      _
    $region11: #{dnn_forward.1} parent=1 // pred_check_branch
      %45 = sbr.rel (0) target = $region13
    $region12: #{dnn_forward.1} parent=1 // pred_region
      _
    $region13: #{dnn_forward.1} parent=1 // pred_fallthru
      _
    // Predicated region
    $region14: #{dnn_forward.1} parent=1 // pred_check
      _
    $region15: #{dnn_forward.1} parent=1 // pred_check_branch
      %47 = sbr.rel (0) target = $region17
    $region16: #{dnn_forward.1} parent=1 // pred_region
      %s49 = ssub.s32 8192, 8192
      %50 = vsyncadd [#allocation7], %s49
      %s51 = sshll.u32 [#allocation8], 4
      %s52 = int_to_ptr.vmem [resolvable:$true] %s51
      %57 = dma.hbm_to_vmem [thread:$0]  %s3, 8192, %s52, [#allocation7], 128, 128, 8
    $region17: #{dnn_forward.1} parent=1 // pred_fallthru
      _
    // Predicated region
    $region18: #{dnn_forward.1} parent=1 // pred_check
      _
    $region19: #{dnn_forward.1} parent=1 // pred_check_branch
      %59 = sbr.rel (0) target = $region21
    $region20: #{dnn_forward.1} parent=1 // pred_region
      _
    $region21: #{dnn_forward.1} parent=1 // pred_fallthru
      _
    // Predicated region
    $region22: #{dnn_forward.1} parent=1 // pred_check
      _
    $region23: #{dnn_forward.1} parent=1 // pred_check_branch
      %61 = sbr.rel (0) target = $region25
    $region24: #{dnn_forward.1} parent=1 // pred_region
      %s63 = ssub.s32 6144, 6144
      %64 = vsyncadd [#allocation10], %s63
      %s65 = sshll.u32 [#allocation9], 4
      %s66 = int_to_ptr.vmem [resolvable:$true] %s65
      %71 = dma.hbm_to_vmem [thread:$0]  %s5, 6144, %s66, [#allocation10], 192, 192, 12
    $region25: #{dnn_forward.1} parent=1 // pred_fallthru
      _
    // Predicated region
    $region26: #{dnn_forward.1} parent=1 // pred_check
      _
    $region27: #{dnn_forward.1} parent=1 // pred_check_branch
      %73 = sbr.rel (0) target = $region29
    $region28: #{dnn_forward.1} parent=1 // pred_region
      _
    $region29: #{dnn_forward.1} parent=1 // pred_fallthru
      _
    // Predicated region
    $region30: #{dnn_forward.1} parent=1 // pred_check
      _
    $region31: #{dnn_forward.1} parent=1 // pred_check_branch
      %75 = sbr.rel (0) target = $region33
    $region32: #{dnn_forward.1} parent=1 // pred_region
      %s77 = ssub.s32 2048, 2048
      %78 = vsyncadd [#allocation10], %s77
      %s79 = sshll.u32 [#allocation11], 4
      %s80 = int_to_ptr.vmem [resolvable:$true] %s79
      %85 = dma.hbm_to_vmem [thread:$0]  %s7, 2048, %s80, [#allocation10], 64, 64, 4
    $region33: #{dnn_forward.1} parent=1 // pred_fallthru
      _
    // Predicated region
    $region34: #{dnn_forward.1} parent=1 // pred_check
      _
    $region35: #{dnn_forward.1} parent=1 // pred_check_branch
      %87 = sbr.rel (0) target = $region37
    $region36: #{dnn_forward.1} parent=1 // pred_region
      _
    $region37: #{dnn_forward.1} parent=1 // pred_fallthru
      _
    // Predicated region
    $region38: #{dnn_forward.1} parent=1 // pred_check
      _
    $region39: #{dnn_forward.1} parent=1 // pred_check_branch
      %89 = sbr.rel (0) target = $region41
    $region40: #{dnn_forward.1} parent=1 // pred_region
      _
    $region41: #{dnn_forward.1} parent=1 // pred_fallthru
      _
    // Predicated region
    $region42: #{dnn_forward.1} parent=1 // pred_check
      _
    $region43: #{dnn_forward.1} parent=1 // pred_check_branch
      %91 = sbr.rel (0) target = $region45
    $region44: #{dnn_forward.1} parent=1 // pred_region
      _
    $region45: #{dnn_forward.1} parent=1 // pred_fallthru
      _
    // Predicated region
    $region46: #{dnn_forward.1} parent=1 // pred_check
      _
    $region47: #{dnn_forward.1} parent=1 // pred_check_branch
      %93 = sbr.rel (0) target = $region49
    $region48: #{dnn_forward.1} parent=1 // pred_region
      %94 = dma.done [#allocation4], 128
    $region49: #{dnn_forward.1} parent=1 // pred_fallthru
      _
    // Predicated region
    $region50: #{dnn_forward.1} parent=1 // pred_check
      _
    $region51: #{dnn_forward.1} parent=1 // pred_check_branch
      %96 = sbr.rel (0) target = $region53
    $region52: #{dnn_forward.1} parent=1 // pred_region
      %97 = dma.done [#allocation7], 1024
    $region53: #{dnn_forward.1} parent=1 // pred_fallthru
      _
    // Predicated region
    $region54: #{dnn_forward.1} parent=1 // pred_check
      _
    $region55: #{dnn_forward.1} parent=1 // pred_check_branch
      %99 = sbr.rel (0) target = $region57
    $region56: #{dnn_forward.1} parent=1 // pred_region
      %100 = dma.done [#allocation7], 8192
    $region57: #{dnn_forward.1} parent=1 // pred_fallthru
      _
    // Predicated region
    $region58: #{dnn_forward.1} parent=1 // pred_check
      _
    $region59: #{dnn_forward.1} parent=1 // pred_check_branch
      %102 = sbr.rel (0) target = $region61
    $region60: #{dnn_forward.1} parent=1 // pred_region
      %103 = dma.done [#allocation10], 6144
    $region61: #{dnn_forward.1} parent=1 // pred_fallthru
      _
    // Predicated region
    $region62: #{dnn_forward.1} parent=1 // pred_check
      _
    $region63: #{dnn_forward.1} parent=1 // pred_check_branch
      %105 = sbr.rel (0) target = $region65
    $region64: #{dnn_forward.1} parent=1 // pred_region
      %106 = dma.done [#allocation10], 2048
    $region65: #{dnn_forward.1} parent=1 // pred_fallthru
      _
    %v108 = vld [vmem:[#allocation3] sm:$0xff]
    %v109 = vpack.c.bf16 %v108, %v108
    %v110 = vld [vmem:[#allocation6] sm:$0xff]
    %v111 = vld [vmem:[#allocation6 + $0x8] sm:$0xff]
    %v112 = vld [vmem:[#allocation6 + $0x10] sm:$0xff]
    %v113 = vld [vmem:[#allocation6 + $0x18] sm:$0xff]
    %v114 = vld [vmem:[#allocation6 + $0x20] sm:$0xff]
    %v115 = vld [vmem:[#allocation6 + $0x28] sm:$0xff]
    %v116 = vld [vmem:[#allocation6 + $0x30] sm:$0xff]
    %v117 = vld [vmem:[#allocation6 + $0x38] sm:$0xff]
    %v126 = vunpack.c.l.b16 %v110
    %v127 = vunpack.c.h.b16 %v110
    %v128 = vunpack.c.l.b16 %v111
    %v129 = vunpack.c.h.b16 %v111
    %v130 = vunpack.c.l.b16 %v112
    %v131 = vunpack.c.h.b16 %v112
    %v132 = vunpack.c.l.b16 %v113
    %v133 = vunpack.c.h.b16 %v113
    %v134 = vunpack.c.l.b16 %v114
    %v135 = vunpack.c.h.b16 %v114
    %v136 = vunpack.c.l.b16 %v115
    %v137 = vunpack.c.h.b16 %v115
    %v138 = vunpack.c.l.b16 %v116
    %v139 = vunpack.c.h.b16 %v116
    %v140 = vunpack.c.l.b16 %v117
    %v141 = vunpack.c.h.b16 %v117
    %v142 = vpack.c.b16 %v130, %v126
    %v143 = vpack.c.b16 %v131, %v127
    %v144 = vpack.c.b16 %v132, %v128
    %v145 = vpack.c.b16 %v133, %v129
    %v146 = vpack.c.b16 %v138, %v134
    %v147 = vpack.c.b16 %v139, %v135
    %v148 = vpack.c.b16 %v140, %v136
    %v149 = vpack.c.b16 %v141, %v137
    %vm158 = vcmask 261120
    %v160 = vsel %vm158, %v109, 0
    %162 = vmatprep.subr.bf16.mxu0 %v143
    %163 = vmatpush1.bf16.msra.mxu0 %v142
    %164 = vmatprep.subr.bf16.mxu0 %v147
    %165 = vmatpush1.bf16.msra.mxu0 %v146
    %166 = vmatprep.subr.bf16.mxu0 0
    %167 = vmatpush1.bf16.msra.mxu0 0
    %168 = vmatprep.subr.bf16.mxu0 0
    %169 = vmatpush1.bf16.msra.mxu0 0
    %170 = vmatprep.subr.bf16.mxu0 0
    %171 = vmatpush1.bf16.msra.mxu0 0
    %172 = vmatprep.subr.bf16.mxu0 0
    %173 = vmatpush1.bf16.msra.mxu0 0
    %174 = vmatprep.subr.bf16.mxu0 0
    %175 = vmatpush1.bf16.msra.mxu0 0
    %176 = vmatprep.subr.bf16.mxu0 0
    %177 = vmatpush1.bf16.msra.mxu0 0
    %178 = vmatprep.subr.bf16.mxu0 0
    %179 = vmatpush1.bf16.msra.mxu0 0
    %180 = vmatprep.subr.bf16.mxu0 0
    %181 = vmatpush1.bf16.msra.mxu0 0
    %182 = vmatprep.subr.bf16.mxu0 0
    %183 = vmatpush1.bf16.msra.mxu0 0
    %184 = vmatprep.subr.bf16.mxu0 0
    %185 = vmatpush1.bf16.msra.mxu0 0
    %186 = vmatprep.subr.bf16.mxu0 0
    %187 = vmatpush1.bf16.msra.mxu0 0
    %188 = vmatprep.subr.bf16.mxu0 0
    %189 = vmatpush1.bf16.msra.mxu0 0
    %190 = vmatprep.subr.bf16.mxu0 0
    %191 = vmatpush1.bf16.msra.mxu0 0
    %192 = vmatprep.subr.bf16.mxu0 0
    %193 = vmatpush1.bf16.msra.mxu0 0
    %194 = vmatprep.mubr.bf16.mxu0 0
    %195 = vmatmul.mubr.bf16.gmra.mrb[0].mxu0 %v160
    %v196 = vpop.f32.mrb[0].mxu0
    %v197 = vadd.f32 0.0, %v196
    %v198 = vpop.f32.mrb[0].mxu0
    %v199 = vadd.f32 0.0, %v198
    %v200 = vpop.f32.mrb[0].mxu0
    %v201 = vpop.f32.mrb[0].mxu0
    %202 = vdwg.mxu0
    %203 = vmatprep.subr.bf16.mxu0 %v145
    %204 = vmatpush1.bf16.msra.mxu0 %v144
    %205 = vmatprep.subr.bf16.mxu0 %v149
    %206 = vmatpush1.bf16.msra.mxu0 %v148
    %207 = vmatprep.subr.bf16.mxu0 0
    %208 = vmatpush1.bf16.msra.mxu0 0
    %209 = vmatprep.subr.bf16.mxu0 0
    %210 = vmatpush1.bf16.msra.mxu0 0
    %211 = vmatprep.subr.bf16.mxu0 0
    %212 = vmatpush1.bf16.msra.mxu0 0
    %213 = vmatprep.subr.bf16.mxu0 0
    %214 = vmatpush1.bf16.msra.mxu0 0
    %215 = vmatprep.subr.bf16.mxu0 0
    %216 = vmatpush1.bf16.msra.mxu0 0
    %217 = vmatprep.subr.bf16.mxu0 0
    %218 = vmatpush1.bf16.msra.mxu0 0
    %219 = vmatprep.subr.bf16.mxu0 0
    %220 = vmatpush1.bf16.msra.mxu0 0
    %221 = vmatprep.subr.bf16.mxu0 0
    %222 = vmatpush1.bf16.msra.mxu0 0
    %223 = vmatprep.subr.bf16.mxu0 0
    %224 = vmatpush1.bf16.msra.mxu0 0
    %225 = vmatprep.subr.bf16.mxu0 0
    %226 = vmatpush1.bf16.msra.mxu0 0
    %227 = vmatprep.subr.bf16.mxu0 0
    %228 = vmatpush1.bf16.msra.mxu0 0
    %229 = vmatprep.subr.bf16.mxu0 0
    %230 = vmatpush1.bf16.msra.mxu0 0
    %231 = vmatprep.subr.bf16.mxu0 0
    %232 = vmatpush1.bf16.msra.mxu0 0
    %233 = vmatprep.subr.bf16.mxu0 0
    %234 = vmatpush1.bf16.msra.mxu0 0
    %235 = vmatprep.mubr.bf16.mxu0 0
    %236 = vmatmul.mubr.bf16.gmra.mrb[0].mxu0 %v160
    %v237 = vpop.f32.mrb[0].mxu0
    %v238 = vadd.f32 0.0, %v237
    %v239 = vpop.f32.mrb[0].mxu0
    %v240 = vadd.f32 0.0, %v239
    %v241 = vpop.f32.mrb[0].mxu0
    %v242 = vpop.f32.mrb[0].mxu0
    %243 = vdwg.mxu0
    %v244 = vpack.c.bf16 %v197, %v197
    %v245 = vpack.c.bf16 %v199, %v199
    %v246 = vpack.c.bf16 %v238, %v238
    %v247 = vpack.c.bf16 %v240, %v240
    %v248 = vld [vmem:[%s2] sm:$0xf]
    %v251 = vunpack.c.l.s4 1966171168
    %v252 = vunpack.c.0.s8 %v251
    %v253 = vlaneseq
    %v254 = vshrl.u32 %v253, 7
    %v255 = vsub.s32 %v252, %v254
    %v256 = vrot.slane %v248, %v255
    %v257 = vcombine.high %v256, %v256
    %v259 = vunpack.c.l.s4 1966171168
    %v260 = vunpack.c.0.s8 %v259
    %v261 = vlaneseq
    %v262 = vshrl.u32 %v261, 7
    %v263 = vsub.s32 %v260, %v262
    %v264 = vrot.slane %v256, %v263
    %v266 = vunpack.c.l.s4 1966171168
    %v267 = vunpack.c.0.s8 %v266
    %v268 = vlaneseq
    %v269 = vshrl.u32 %v268, 7
    %v270 = vsub.s32 %v267, %v269
    %v271 = vrot.slane %v257, %v270
    %v272 = vcombine.high %v264, %v264
    %v273 = vcombine.high %v271, %v271
    %v275 = vpack.i.b16 %v264, %v264
    %v277 = vlaneseq
    %v278 = vshrl.u32 %v277, 7
    %v279 = vsub.s32 0, %v278
    %v280 = vrot.slane %v275, %v279
    %v282 = vpack.i.b16 %v271, %v271
    %v284 = vlaneseq
    %v285 = vshrl.u32 %v284, 7
    %v286 = vsub.s32 0, %v285
    %v287 = vrot.slane %v282, %v286
    %v289 = vpack.i.b16 %v272, %v272
    %v291 = vlaneseq
    %v292 = vshrl.u32 %v291, 7
    %v293 = vsub.s32 0, %v292
    %v294 = vrot.slane %v289, %v293
    %v296 = vpack.i.b16 %v273, %v273
    %v298 = vlaneseq
    %v299 = vshrl.u32 %v298, 7
    %v300 = vsub.s32 0, %v299
    %v301 = vrot.slane %v296, %v300
    %v302 = vadd.bf16 %v244, %v280
    %v303 = vadd.bf16 %v245, %v287
    %v304 = vadd.bf16 %v246, %v294
    %v305 = vadd.bf16 %v247, %v301
    %v306 = vmax.bf16 %v302, 0
    %v307 = vmax.bf16 %v303, 0
    %v308 = vmax.bf16 %v304, 0
    %v309 = vmax.bf16 %v305, 0
    %v310 = vld [vmem:[#allocation8] sm:$0xff]
    %v311 = vld [vmem:[#allocation8 + $0x8] sm:$0xff]
    %v312 = vld [vmem:[#allocation8 + $0x10] sm:$0xff]
    %v313 = vld [vmem:[#allocation8 + $0x18] sm:$0xff]
    %v314 = vld [vmem:[#allocation8 + $0x20] sm:$0xff]
    %v315 = vld [vmem:[#allocation8 + $0x28] sm:$0xff]
    %v316 = vld [vmem:[#allocation8 + $0x30] sm:$0xff]
    %v317 = vld [vmem:[#allocation8 + $0x38] sm:$0xff]
    %v318 = vld [vmem:[#allocation8 + $0x40] sm:$0xff]
    %v319 = vld [vmem:[#allocation8 + $0x48] sm:$0xff]
    %v320 = vld [vmem:[#allocation8 + $0x50] sm:$0xff]
    %v321 = vld [vmem:[#allocation8 + $0x58] sm:$0xff]
    %v322 = vld [vmem:[#allocation8 + $0x60] sm:$0xff]
    %v323 = vld [vmem:[#allocation8 + $0x68] sm:$0xff]
    %v324 = vld [vmem:[#allocation8 + $0x70] sm:$0xff]
    %v325 = vld [vmem:[#allocation8 + $0x78] sm:$0xff]
    %v326 = vld [vmem:[#allocation8 + $0x80] sm:$0xff]
    %v327 = vld [vmem:[#allocation8 + $0x88] sm:$0xff]
    %v328 = vld [vmem:[#allocation8 + $0x90] sm:$0xff]
    %v329 = vld [vmem:[#allocation8 + $0x98] sm:$0xff]
    %v330 = vld [vmem:[#allocation8 + $0xa0] sm:$0xff]
    %v331 = vld [vmem:[#allocation8 + $0xa8] sm:$0xff]
    %v332 = vld [vmem:[#allocation8 + $0xb0] sm:$0xff]
    %v333 = vld [vmem:[#allocation8 + $0xb8] sm:$0xff]
    %v334 = vld [vmem:[#allocation8 + $0xc0] sm:$0xff]
    %v335 = vld [vmem:[#allocation8 + $0xc8] sm:$0xff]
    %v336 = vld [vmem:[#allocation8 + $0xd0] sm:$0xff]
    %v337 = vld [vmem:[#allocation8 + $0xd8] sm:$0xff]
    %v338 = vld [vmem:[#allocation8 + $0xe0] sm:$0xff]
    %v339 = vld [vmem:[#allocation8 + $0xe8] sm:$0xff]
    %v340 = vld [vmem:[#allocation8 + $0xf0] sm:$0xff]
    %v341 = vld [vmem:[#allocation8 + $0xf8] sm:$0xff]
    %v342 = vld [vmem:[#allocation8 + $0x100] sm:$0xff]
    %v343 = vld [vmem:[#allocation8 + $0x108] sm:$0xff]
    %v344 = vld [vmem:[#allocation8 + $0x110] sm:$0xff]
    %v345 = vld [vmem:[#allocation8 + $0x118] sm:$0xff]
    %v346 = vld [vmem:[#allocation8 + $0x120] sm:$0xff]
    %v347 = vld [vmem:[#allocation8 + $0x128] sm:$0xff]
    %v348 = vld [vmem:[#allocation8 + $0x130] sm:$0xff]
    %v349 = vld [vmem:[#allocation8 + $0x138] sm:$0xff]
    %v350 = vld [vmem:[#allocation8 + $0x140] sm:$0xff]
    %v351 = vld [vmem:[#allocation8 + $0x148] sm:$0xff]
    %v352 = vld [vmem:[#allocation8 + $0x150] sm:$0xff]
    %v353 = vld [vmem:[#allocation8 + $0x158] sm:$0xff]
    %v354 = vld [vmem:[#allocation8 + $0x160] sm:$0xff]
    %v355 = vld [vmem:[#allocation8 + $0x168] sm:$0xff]
    %v356 = vld [vmem:[#allocation8 + $0x170] sm:$0xff]
    %v357 = vld [vmem:[#allocation8 + $0x178] sm:$0xff]
    %v358 = vld [vmem:[#allocation8 + $0x180] sm:$0xff]
    %v359 = vld [vmem:[#allocation8 + $0x188] sm:$0xff]
    %v360 = vld [vmem:[#allocation8 + $0x190] sm:$0xff]
    %v361 = vld [vmem:[#allocation8 + $0x198] sm:$0xff]
    %v362 = vld [vmem:[#allocation8 + $0x1a0] sm:$0xff]
    %v363 = vld [vmem:[#allocation8 + $0x1a8] sm:$0xff]
    %v364 = vld [vmem:[#allocation8 + $0x1b0] sm:$0xff]
    %v365 = vld [vmem:[#allocation8 + $0x1b8] sm:$0xff]
    %v366 = vld [vmem:[#allocation8 + $0x1c0] sm:$0xff]
    %v367 = vld [vmem:[#allocation8 + $0x1c8] sm:$0xff]
    %v368 = vld [vmem:[#allocation8 + $0x1d0] sm:$0xff]
    %v369 = vld [vmem:[#allocation8 + $0x1d8] sm:$0xff]
    %v370 = vld [vmem:[#allocation8 + $0x1e0] sm:$0xff]
    %v371 = vld [vmem:[#allocation8 + $0x1e8] sm:$0xff]
    %v372 = vld [vmem:[#allocation8 + $0x1f0] sm:$0xff]
    %v373 = vld [vmem:[#allocation8 + $0x1f8] sm:$0xff]
    %v438 = vunpack.c.l.b16 %v310
    %v439 = vunpack.c.h.b16 %v310
    %v440 = vunpack.c.l.b16 %v311
    %v441 = vunpack.c.h.b16 %v311
    %v442 = vunpack.c.l.b16 %v312
    %v443 = vunpack.c.h.b16 %v312
    %v444 = vunpack.c.l.b16 %v313
    %v445 = vunpack.c.h.b16 %v313
    %v446 = vunpack.c.l.b16 %v314
    %v447 = vunpack.c.h.b16 %v314
    %v448 = vunpack.c.l.b16 %v315
    %v449 = vunpack.c.h.b16 %v315
    %v450 = vunpack.c.l.b16 %v316
    %v451 = vunpack.c.h.b16 %v316
    %v452 = vunpack.c.l.b16 %v317
    %v453 = vunpack.c.h.b16 %v317
    %v454 = vunpack.c.l.b16 %v318
    %v455 = vunpack.c.h.b16 %v318
    %v456 = vunpack.c.l.b16 %v319
    %v457 = vunpack.c.h.b16 %v319
    %v458 = vunpack.c.l.b16 %v320
    %v459 = vunpack.c.h.b16 %v320
    %v460 = vunpack.c.l.b16 %v321
    %v461 = vunpack.c.h.b16 %v321
    %v462 = vunpack.c.l.b16 %v322
    %v463 = vunpack.c.h.b16 %v322
    %v464 = vunpack.c.l.b16 %v323
    %v465 = vunpack.c.h.b16 %v323
    %v466 = vunpack.c.l.b16 %v324
    %v467 = vunpack.c.h.b16 %v324
    %v468 = vunpack.c.l.b16 %v325
    %v469 = vunpack.c.h.b16 %v325
    %v470 = vunpack.c.l.b16 %v326
    %v471 = vunpack.c.h.b16 %v326
    %v472 = vunpack.c.l.b16 %v327
    %v473 = vunpack.c.h.b16 %v327
    %v474 = vunpack.c.l.b16 %v328
    %v475 = vunpack.c.h.b16 %v328
    %v476 = vunpack.c.l.b16 %v329
    %v477 = vunpack.c.h.b16 %v329
    %v478 = vunpack.c.l.b16 %v330
    %v479 = vunpack.c.h.b16 %v330
    %v480 = vunpack.c.l.b16 %v331
    %v481 = vunpack.c.h.b16 %v331
    %v482 = vunpack.c.l.b16 %v332
    %v483 = vunpack.c.h.b16 %v332
    %v484 = vunpack.c.l.b16 %v333
    %v485 = vunpack.c.h.b16 %v333
    %v486 = vunpack.c.l.b16 %v334
    %v487 = vunpack.c.h.b16 %v334
    %v488 = vunpack.c.l.b16 %v335
    %v489 = vunpack.c.h.b16 %v335
    %v490 = vunpack.c.l.b16 %v336
    %v491 = vunpack.c.h.b16 %v336
    %v492 = vunpack.c.l.b16 %v337
    %v493 = vunpack.c.h.b16 %v337
    %v494 = vunpack.c.l.b16 %v338
    %v495 = vunpack.c.h.b16 %v338
    %v496 = vunpack.c.l.b16 %v339
    %v497 = vunpack.c.h.b16 %v339
    %v498 = vunpack.c.l.b16 %v340
    %v499 = vunpack.c.h.b16 %v340
    %v500 = vunpack.c.l.b16 %v341
    %v501 = vunpack.c.h.b16 %v341
    %v502 = vunpack.c.l.b16 %v342
    %v503 = vunpack.c.h.b16 %v342
    %v504 = vunpack.c.l.b16 %v343
    %v505 = vunpack.c.h.b16 %v343
    %v506 = vunpack.c.l.b16 %v344
    %v507 = vunpack.c.h.b16 %v344
    %v508 = vunpack.c.l.b16 %v345
    %v509 = vunpack.c.h.b16 %v345
    %v510 = vunpack.c.l.b16 %v346
    %v511 = vunpack.c.h.b16 %v346
    %v512 = vunpack.c.l.b16 %v347
    %v513 = vunpack.c.h.b16 %v347
    %v514 = vunpack.c.l.b16 %v348
    %v515 = vunpack.c.h.b16 %v348
    %v516 = vunpack.c.l.b16 %v349
    %v517 = vunpack.c.h.b16 %v349
    %v518 = vunpack.c.l.b16 %v350
    %v519 = vunpack.c.h.b16 %v350
    %v520 = vunpack.c.l.b16 %v351
    %v521 = vunpack.c.h.b16 %v351
    %v522 = vunpack.c.l.b16 %v352
    %v523 = vunpack.c.h.b16 %v352
    %v524 = vunpack.c.l.b16 %v353
    %v525 = vunpack.c.h.b16 %v353
    %v526 = vunpack.c.l.b16 %v354
    %v527 = vunpack.c.h.b16 %v354
    %v528 = vunpack.c.l.b16 %v355
    %v529 = vunpack.c.h.b16 %v355
    %v530 = vunpack.c.l.b16 %v356
    %v531 = vunpack.c.h.b16 %v356
    %v532 = vunpack.c.l.b16 %v357
    %v533 = vunpack.c.h.b16 %v357
    %v534 = vunpack.c.l.b16 %v358
    %v535 = vunpack.c.h.b16 %v358
    %v536 = vunpack.c.l.b16 %v359
    %v537 = vunpack.c.h.b16 %v359
    %v538 = vunpack.c.l.b16 %v360
    %v539 = vunpack.c.h.b16 %v360
    %v540 = vunpack.c.l.b16 %v361
    %v541 = vunpack.c.h.b16 %v361
    %v542 = vunpack.c.l.b16 %v362
    %v543 = vunpack.c.h.b16 %v362
    %v544 = vunpack.c.l.b16 %v363
    %v545 = vunpack.c.h.b16 %v363
    %v546 = vunpack.c.l.b16 %v364
    %v547 = vunpack.c.h.b16 %v364
    %v548 = vunpack.c.l.b16 %v365
    %v549 = vunpack.c.h.b16 %v365
    %v550 = vunpack.c.l.b16 %v366
    %v551 = vunpack.c.h.b16 %v366
    %v552 = vunpack.c.l.b16 %v367
    %v553 = vunpack.c.h.b16 %v367
    %v554 = vunpack.c.l.b16 %v368
    %v555 = vunpack.c.h.b16 %v368
    %v556 = vunpack.c.l.b16 %v369
    %v557 = vunpack.c.h.b16 %v369
    %v558 = vunpack.c.l.b16 %v370
    %v559 = vunpack.c.h.b16 %v370
    %v560 = vunpack.c.l.b16 %v371
    %v561 = vunpack.c.h.b16 %v371
    %v562 = vunpack.c.l.b16 %v372
    %v563 = vunpack.c.h.b16 %v372
    %v564 = vunpack.c.l.b16 %v373
    %v565 = vunpack.c.h.b16 %v373
    %v566 = vpack.c.b16 %v440, %v438
    %v567 = vpack.c.b16 %v441, %v439
    %v568 = vpack.c.b16 %v444, %v442
    %v569 = vpack.c.b16 %v445, %v443
    %v570 = vpack.c.b16 %v448, %v446
    %v571 = vpack.c.b16 %v449, %v447
    %v572 = vpack.c.b16 %v452, %v450
    %v573 = vpack.c.b16 %v453, %v451
    %v574 = vpack.c.b16 %v456, %v454
    %v575 = vpack.c.b16 %v457, %v455
    %v576 = vpack.c.b16 %v460, %v458
    %v577 = vpack.c.b16 %v461, %v459
    %v578 = vpack.c.b16 %v464, %v462
    %v579 = vpack.c.b16 %v465, %v463
    %v580 = vpack.c.b16 %v468, %v466
    %v581 = vpack.c.b16 %v469, %v467
    %v582 = vpack.c.b16 %v472, %v470
    %v583 = vpack.c.b16 %v473, %v471
    %v584 = vpack.c.b16 %v476, %v474
    %v585 = vpack.c.b16 %v477, %v475
    %v586 = vpack.c.b16 %v480, %v478
    %v587 = vpack.c.b16 %v481, %v479
    %v588 = vpack.c.b16 %v484, %v482
    %v589 = vpack.c.b16 %v485, %v483
    %v590 = vpack.c.b16 %v488, %v486
    %v591 = vpack.c.b16 %v489, %v487
    %v592 = vpack.c.b16 %v492, %v490
    %v593 = vpack.c.b16 %v493, %v491
    %v594 = vpack.c.b16 %v496, %v494
    %v595 = vpack.c.b16 %v497, %v495
    %v596 = vpack.c.b16 %v500, %v498
    %v597 = vpack.c.b16 %v501, %v499
    %v598 = vpack.c.b16 %v504, %v502
    %v599 = vpack.c.b16 %v505, %v503
    %v600 = vpack.c.b16 %v508, %v506
    %v601 = vpack.c.b16 %v509, %v507
    %v602 = vpack.c.b16 %v512, %v510
    %v603 = vpack.c.b16 %v513, %v511
    %v604 = vpack.c.b16 %v516, %v514
    %v605 = vpack.c.b16 %v517, %v515
    %v606 = vpack.c.b16 %v520, %v518
    %v607 = vpack.c.b16 %v521, %v519
    %v608 = vpack.c.b16 %v524, %v522
    %v609 = vpack.c.b16 %v525, %v523
    %v610 = vpack.c.b16 %v528, %v526
    %v611 = vpack.c.b16 %v529, %v527
    %v612 = vpack.c.b16 %v532, %v530
    %v613 = vpack.c.b16 %v533, %v531
    %v614 = vpack.c.b16 %v536, %v534
    %v615 = vpack.c.b16 %v537, %v535
    %v616 = vpack.c.b16 %v540, %v538
    %v617 = vpack.c.b16 %v541, %v539
    %v618 = vpack.c.b16 %v544, %v542
    %v619 = vpack.c.b16 %v545, %v543
    %v620 = vpack.c.b16 %v548, %v546
    %v621 = vpack.c.b16 %v549, %v547
    %v622 = vpack.c.b16 %v552, %v550
    %v623 = vpack.c.b16 %v553, %v551
    %v624 = vpack.c.b16 %v556, %v554
    %v625 = vpack.c.b16 %v557, %v555
    %v626 = vpack.c.b16 %v560, %v558
    %v627 = vpack.c.b16 %v561, %v559
    %v628 = vpack.c.b16 %v564, %v562
    %v629 = vpack.c.b16 %v565, %v563
    %694 = vmatprep.subr.bf16.mxu0 %v567
    %695 = vmatpush1.bf16.msra.mxu0 %v566
    %696 = vmatprep.subr.bf16.mxu0 %v569
    %697 = vmatpush1.bf16.msra.mxu0 %v568
    %698 = vmatprep.subr.bf16.mxu0 %v571
    %699 = vmatpush1.bf16.msra.mxu0 %v570
    %700 = vmatprep.subr.bf16.mxu0 %v573
    %701 = vmatpush1.bf16.msra.mxu0 %v572
    %702 = vmatprep.subr.bf16.mxu0 %v575
    %703 = vmatpush1.bf16.msra.mxu0 %v574
    %704 = vmatprep.subr.bf16.mxu0 %v577
    %705 = vmatpush1.bf16.msra.mxu0 %v576
    %706 = vmatprep.subr.bf16.mxu0 %v579
    %707 = vmatpush1.bf16.msra.mxu0 %v578
    %708 = vmatprep.subr.bf16.mxu0 %v581
    %709 = vmatpush1.bf16.msra.mxu0 %v580
    %710 = vmatprep.subr.bf16.mxu0 %v583
    %711 = vmatpush1.bf16.msra.mxu0 %v582
    %712 = vmatprep.subr.bf16.mxu0 %v585
    %713 = vmatpush1.bf16.msra.mxu0 %v584
    %714 = vmatprep.subr.bf16.mxu0 %v587
    %715 = vmatpush1.bf16.msra.mxu0 %v586
    %716 = vmatprep.subr.bf16.mxu0 %v589
    %717 = vmatpush1.bf16.msra.mxu0 %v588
    %718 = vmatprep.subr.bf16.mxu0 %v591
    %719 = vmatpush1.bf16.msra.mxu0 %v590
    %720 = vmatprep.subr.bf16.mxu0 %v593
    %721 = vmatpush1.bf16.msra.mxu0 %v592
    %722 = vmatprep.subr.bf16.mxu0 %v595
    %723 = vmatpush1.bf16.msra.mxu0 %v594
    %724 = vmatprep.subr.bf16.mxu0 %v597
    %725 = vmatpush1.bf16.msra.mxu0 %v596
    %726 = vmatprep.mubr.bf16.mxu0 %v307
    %727 = vmatmul.mubr.bf16.gmra.mrb[0].mxu0 %v306
    %v728 = vpop.f32.mrb[0].mxu0
    %v729 = vadd.f32 0.0, %v728
    %v730 = vpop.f32.mrb[0].mxu0
    %v731 = vadd.f32 0.0, %v730
    %v732 = vpop.f32.mrb[0].mxu0
    %v733 = vpop.f32.mrb[0].mxu0
    %734 = vdwg.mxu0
    %735 = vmatprep.subr.bf16.mxu0 %v599
    %736 = vmatpush1.bf16.msra.mxu0 %v598
    %737 = vmatprep.subr.bf16.mxu0 %v601
    %738 = vmatpush1.bf16.msra.mxu0 %v600
    %739 = vmatprep.subr.bf16.mxu0 %v603
    %740 = vmatpush1.bf16.msra.mxu0 %v602
    %741 = vmatprep.subr.bf16.mxu0 %v605
    %742 = vmatpush1.bf16.msra.mxu0 %v604
    %743 = vmatprep.subr.bf16.mxu0 %v607
    %744 = vmatpush1.bf16.msra.mxu0 %v606
    %745 = vmatprep.subr.bf16.mxu0 %v609
    %746 = vmatpush1.bf16.msra.mxu0 %v608
    %747 = vmatprep.subr.bf16.mxu0 %v611
    %748 = vmatpush1.bf16.msra.mxu0 %v610
    %749 = vmatprep.subr.bf16.mxu0 %v613
    %750 = vmatpush1.bf16.msra.mxu0 %v612
    %751 = vmatprep.subr.bf16.mxu0 %v615
    %752 = vmatpush1.bf16.msra.mxu0 %v614
    %753 = vmatprep.subr.bf16.mxu0 %v617
    %754 = vmatpush1.bf16.msra.mxu0 %v616
    %755 = vmatprep.subr.bf16.mxu0 %v619
    %756 = vmatpush1.bf16.msra.mxu0 %v618
    %757 = vmatprep.subr.bf16.mxu0 %v621
    %758 = vmatpush1.bf16.msra.mxu0 %v620
    %759 = vmatprep.subr.bf16.mxu0 %v623
    %760 = vmatpush1.bf16.msra.mxu0 %v622
    %761 = vmatprep.subr.bf16.mxu0 %v625
    %762 = vmatpush1.bf16.msra.mxu0 %v624
    %763 = vmatprep.subr.bf16.mxu0 %v627
    %764 = vmatpush1.bf16.msra.mxu0 %v626
    %765 = vmatprep.subr.bf16.mxu0 %v629
    %766 = vmatpush1.bf16.msra.mxu0 %v628
    %767 = vmatprep.mubr.bf16.mxu0 %v309
    %768 = vmatmul.mubr.bf16.gmra.mrb[0].mxu0 %v308
    %v769 = vpop.f32.mrb[0].mxu0
    %v770 = vadd.f32 %v729, %v769
    %v771 = vpop.f32.mrb[0].mxu0
    %v772 = vadd.f32 %v731, %v771
    %v773 = vpop.f32.mrb[0].mxu0
    %v774 = vpop.f32.mrb[0].mxu0
    %775 = vdwg.mxu0
    %v776 = vpack.c.bf16 %v770, %v770
    %v777 = vpack.c.bf16 %v772, %v772
    %v778 = vld [vmem:[%s4] sm:$0x3]
    %v781 = vunpack.c.l.s4 1966171168
    %v782 = vunpack.c.0.s8 %v781
    %v783 = vlaneseq
    %v784 = vshrl.u32 %v783, 7
    %v785 = vsub.s32 %v782, %v784
    %v786 = vrot.slane %v778, %v785
    %v787 = vcombine.high %v786, %v786
    %v789 = vunpack.c.l.s4 1966171168
    %v790 = vunpack.c.0.s8 %v789
    %v791 = vlaneseq
    %v792 = vshrl.u32 %v791, 7
    %v793 = vsub.s32 %v790, %v792
    %v794 = vrot.slane %v786, %v793
    %v796 = vunpack.c.l.s4 1966171168
    %v797 = vunpack.c.0.s8 %v796
    %v798 = vlaneseq
    %v799 = vshrl.u32 %v798, 7
    %v800 = vsub.s32 %v797, %v799
    %v801 = vrot.slane %v787, %v800
    %v803 = vpack.i.b16 %v794, %v794
    %v805 = vlaneseq
    %v806 = vshrl.u32 %v805, 7
    %v807 = vsub.s32 0, %v806
    %v808 = vrot.slane %v803, %v807
    %v810 = vpack.i.b16 %v801, %v801
    %v812 = vlaneseq
    %v813 = vshrl.u32 %v812, 7
    %v814 = vsub.s32 0, %v813
    %v815 = vrot.slane %v810, %v814
    %v816 = vadd.bf16 %v776, %v808
    %v817 = vadd.bf16 %v777, %v815
    %v818 = vmax.bf16 %v816, 0
    %v819 = vmax.bf16 %v817, 0
    %v820 = vld [vmem:[#allocation9] sm:$0xff]
    %v821 = vld [vmem:[#allocation9 + $0x8] sm:$0xf]
    %v822 = vld [vmem:[#allocation9 + $0xc] sm:$0xff]
    %v823 = vld [vmem:[#allocation9 + $0x14] sm:$0xf]
    %v824 = vld [vmem:[#allocation9 + $0x18] sm:$0xff]
    %v825 = vld [vmem:[#allocation9 + $0x20] sm:$0xf]
    %v826 = vld [vmem:[#allocation9 + $0x24] sm:$0xff]
    %v827 = vld [vmem:[#allocation9 + $0x2c] sm:$0xf]
    %v828 = vld [vmem:[#allocation9 + $0x30] sm:$0xff]
    %v829 = vld [vmem:[#allocation9 + $0x38] sm:$0xf]
    %v830 = vld [vmem:[#allocation9 + $0x3c] sm:$0xff]
    %v831 = vld [vmem:[#allocation9 + $0x44] sm:$0xf]
    %v832 = vld [vmem:[#allocation9 + $0x48] sm:$0xff]
    %v833 = vld [vmem:[#allocation9 + $0x50] sm:$0xf]
    %v834 = vld [vmem:[#allocation9 + $0x54] sm:$0xff]
    %v835 = vld [vmem:[#allocation9 + $0x5c] sm:$0xf]
    %v836 = vld [vmem:[#allocation9 + $0x60] sm:$0xff]
    %v837 = vld [vmem:[#allocation9 + $0x68] sm:$0xf]
    %v838 = vld [vmem:[#allocation9 + $0x6c] sm:$0xff]
    %v839 = vld [vmem:[#allocation9 + $0x74] sm:$0xf]
    %v840 = vld [vmem:[#allocation9 + $0x78] sm:$0xff]
    %v841 = vld [vmem:[#allocation9 + $0x80] sm:$0xf]
    %v842 = vld [vmem:[#allocation9 + $0x84] sm:$0xff]
    %v843 = vld [vmem:[#allocation9 + $0x8c] sm:$0xf]
    %v844 = vld [vmem:[#allocation9 + $0x90] sm:$0xff]
    %v845 = vld [vmem:[#allocation9 + $0x98] sm:$0xf]
    %v846 = vld [vmem:[#allocation9 + $0x9c] sm:$0xff]
    %v847 = vld [vmem:[#allocation9 + $0xa4] sm:$0xf]
    %v848 = vld [vmem:[#allocation9 + $0xa8] sm:$0xff]
    %v849 = vld [vmem:[#allocation9 + $0xb0] sm:$0xf]
    %v850 = vld [vmem:[#allocation9 + $0xb4] sm:$0xff]
    %v851 = vld [vmem:[#allocation9 + $0xbc] sm:$0xf]
    %v852 = vld [vmem:[#allocation9 + $0xc0] sm:$0xff]
    %v853 = vld [vmem:[#allocation9 + $0xc8] sm:$0xf]
    %v854 = vld [vmem:[#allocation9 + $0xcc] sm:$0xff]
    %v855 = vld [vmem:[#allocation9 + $0xd4] sm:$0xf]
    %v856 = vld [vmem:[#allocation9 + $0xd8] sm:$0xff]
    %v857 = vld [vmem:[#allocation9 + $0xe0] sm:$0xf]
    %v858 = vld [vmem:[#allocation9 + $0xe4] sm:$0xff]
    %v859 = vld [vmem:[#allocation9 + $0xec] sm:$0xf]
    %v860 = vld [vmem:[#allocation9 + $0xf0] sm:$0xff]
    %v861 = vld [vmem:[#allocation9 + $0xf8] sm:$0xf]
    %v862 = vld [vmem:[#allocation9 + $0xfc] sm:$0xff]
    %v863 = vld [vmem:[#allocation9 + $0x104] sm:$0xf]
    %v864 = vld [vmem:[#allocation9 + $0x108] sm:$0xff]
    %v865 = vld [vmem:[#allocation9 + $0x110] sm:$0xf]
    %v866 = vld [vmem:[#allocation9 + $0x114] sm:$0xff]
    %v867 = vld [vmem:[#allocation9 + $0x11c] sm:$0xf]
    %v868 = vld [vmem:[#allocation9 + $0x120] sm:$0xff]
    %v869 = vld [vmem:[#allocation9 + $0x128] sm:$0xf]
    %v870 = vld [vmem:[#allocation9 + $0x12c] sm:$0xff]
    %v871 = vld [vmem:[#allocation9 + $0x134] sm:$0xf]
    %v872 = vld [vmem:[#allocation9 + $0x138] sm:$0xff]
    %v873 = vld [vmem:[#allocation9 + $0x140] sm:$0xf]
    %v874 = vld [vmem:[#allocation9 + $0x144] sm:$0xff]
    %v875 = vld [vmem:[#allocation9 + $0x14c] sm:$0xf]
    %v876 = vld [vmem:[#allocation9 + $0x150] sm:$0xff]
    %v877 = vld [vmem:[#allocation9 + $0x158] sm:$0xf]
    %v878 = vld [vmem:[#allocation9 + $0x15c] sm:$0xff]
    %v879 = vld [vmem:[#allocation9 + $0x164] sm:$0xf]
    %v880 = vld [vmem:[#allocation9 + $0x168] sm:$0xff]
    %v881 = vld [vmem:[#allocation9 + $0x170] sm:$0xf]
    %v882 = vld [vmem:[#allocation9 + $0x174] sm:$0xff]
    %v883 = vld [vmem:[#allocation9 + $0x17c] sm:$0xf]
    %v948 = vunpack.c.l.b16 %v820
    %v949 = vunpack.c.h.b16 %v820
    %v950 = vunpack.c.l.b16 %v821
    %v951 = vunpack.c.l.b16 %v822
    %v952 = vunpack.c.h.b16 %v822
    %v953 = vunpack.c.l.b16 %v823
    %v954 = vunpack.c.l.b16 %v824
    %v955 = vunpack.c.h.b16 %v824
    %v956 = vunpack.c.l.b16 %v825
    %v957 = vunpack.c.l.b16 %v826
    %v958 = vunpack.c.h.b16 %v826
    %v959 = vunpack.c.l.b16 %v827
    %v960 = vunpack.c.l.b16 %v828
    %v961 = vunpack.c.h.b16 %v828
    %v962 = vunpack.c.l.b16 %v829
    %v963 = vunpack.c.l.b16 %v830
    %v964 = vunpack.c.h.b16 %v830
    %v965 = vunpack.c.l.b16 %v831
    %v966 = vunpack.c.l.b16 %v832
    %v967 = vunpack.c.h.b16 %v832
    %v968 = vunpack.c.l.b16 %v833
    %v969 = vunpack.c.l.b16 %v834
    %v970 = vunpack.c.h.b16 %v834
    %v971 = vunpack.c.l.b16 %v835
    %v972 = vunpack.c.l.b16 %v836
    %v973 = vunpack.c.h.b16 %v836
    %v974 = vunpack.c.l.b16 %v837
    %v975 = vunpack.c.l.b16 %v838
    %v976 = vunpack.c.h.b16 %v838
    %v977 = vunpack.c.l.b16 %v839
    %v978 = vunpack.c.l.b16 %v840
    %v979 = vunpack.c.h.b16 %v840
    %v980 = vunpack.c.l.b16 %v841
    %v981 = vunpack.c.l.b16 %v842
    %v982 = vunpack.c.h.b16 %v842
    %v983 = vunpack.c.l.b16 %v843
    %v984 = vunpack.c.l.b16 %v844
    %v985 = vunpack.c.h.b16 %v844
    %v986 = vunpack.c.l.b16 %v845
    %v987 = vunpack.c.l.b16 %v846
    %v988 = vunpack.c.h.b16 %v846
    %v989 = vunpack.c.l.b16 %v847
    %v990 = vunpack.c.l.b16 %v848
    %v991 = vunpack.c.h.b16 %v848
    %v992 = vunpack.c.l.b16 %v849
    %v993 = vunpack.c.l.b16 %v850
    %v994 = vunpack.c.h.b16 %v850
    %v995 = vunpack.c.l.b16 %v851
    %v996 = vunpack.c.l.b16 %v852
    %v997 = vunpack.c.h.b16 %v852
    %v998 = vunpack.c.l.b16 %v853
    %v999 = vunpack.c.l.b16 %v854
    %v1000 = vunpack.c.h.b16 %v854
    %v1001 = vunpack.c.l.b16 %v855
    %v1002 = vunpack.c.l.b16 %v856
    %v1003 = vunpack.c.h.b16 %v856
    %v1004 = vunpack.c.l.b16 %v857
    %v1005 = vunpack.c.l.b16 %v858
    %v1006 = vunpack.c.h.b16 %v858
    %v1007 = vunpack.c.l.b16 %v859
    %v1008 = vunpack.c.l.b16 %v860
    %v1009 = vunpack.c.h.b16 %v860
    %v1010 = vunpack.c.l.b16 %v861
    %v1011 = vunpack.c.l.b16 %v862
    %v1012 = vunpack.c.h.b16 %v862
    %v1013 = vunpack.c.l.b16 %v863
    %v1014 = vunpack.c.l.b16 %v864
    %v1015 = vunpack.c.h.b16 %v864
    %v1016 = vunpack.c.l.b16 %v865
    %v1017 = vunpack.c.l.b16 %v866
    %v1018 = vunpack.c.h.b16 %v866
    %v1019 = vunpack.c.l.b16 %v867
    %v1020 = vunpack.c.l.b16 %v868
    %v1021 = vunpack.c.h.b16 %v868
    %v1022 = vunpack.c.l.b16 %v869
    %v1023 = vunpack.c.l.b16 %v870
    %v1024 = vunpack.c.h.b16 %v870
    %v1025 = vunpack.c.l.b16 %v871
    %v1026 = vunpack.c.l.b16 %v872
    %v1027 = vunpack.c.h.b16 %v872
    %v1028 = vunpack.c.l.b16 %v873
    %v1029 = vunpack.c.l.b16 %v874
    %v1030 = vunpack.c.h.b16 %v874
    %v1031 = vunpack.c.l.b16 %v875
    %v1032 = vunpack.c.l.b16 %v876
    %v1033 = vunpack.c.h.b16 %v876
    %v1034 = vunpack.c.l.b16 %v877
    %v1035 = vunpack.c.l.b16 %v878
    %v1036 = vunpack.c.h.b16 %v878
    %v1037 = vunpack.c.l.b16 %v879
    %v1038 = vunpack.c.l.b16 %v880
    %v1039 = vunpack.c.h.b16 %v880
    %v1040 = vunpack.c.l.b16 %v881
    %v1041 = vunpack.c.l.b16 %v882
    %v1042 = vunpack.c.h.b16 %v882
    %v1043 = vunpack.c.l.b16 %v883
    %v1044 = vpack.c.b16 %v951, %v948
    %v1045 = vpack.c.b16 %v952, %v949
    %v1046 = vpack.c.b16 %v953, %v950
    %v1047 = vpack.c.b16 %v957, %v954
    %v1048 = vpack.c.b16 %v958, %v955
    %v1049 = vpack.c.b16 %v959, %v956
    %v1050 = vpack.c.b16 %v963, %v960
    %v1051 = vpack.c.b16 %v964, %v961
    %v1052 = vpack.c.b16 %v965, %v962
    %v1053 = vpack.c.b16 %v969, %v966
    %v1054 = vpack.c.b16 %v970, %v967
    %v1055 = vpack.c.b16 %v971, %v968
    %v1056 = vpack.c.b16 %v975, %v972
    %v1057 = vpack.c.b16 %v976, %v973
    %v1058 = vpack.c.b16 %v977, %v974
    %v1059 = vpack.c.b16 %v981, %v978
    %v1060 = vpack.c.b16 %v982, %v979
    %v1061 = vpack.c.b16 %v983, %v980
    %v1062 = vpack.c.b16 %v987, %v984
    %v1063 = vpack.c.b16 %v988, %v985
    %v1064 = vpack.c.b16 %v989, %v986
    %v1065 = vpack.c.b16 %v993, %v990
    %v1066 = vpack.c.b16 %v994, %v991
    %v1067 = vpack.c.b16 %v995, %v992
    %v1068 = vpack.c.b16 %v999, %v996
    %v1069 = vpack.c.b16 %v1000, %v997
    %v1070 = vpack.c.b16 %v1001, %v998
    %v1071 = vpack.c.b16 %v1005, %v1002
    %v1072 = vpack.c.b16 %v1006, %v1003
    %v1073 = vpack.c.b16 %v1007, %v1004
    %v1074 = vpack.c.b16 %v1011, %v1008
    %v1075 = vpack.c.b16 %v1012, %v1009
    %v1076 = vpack.c.b16 %v1013, %v1010
    %v1077 = vpack.c.b16 %v1017, %v1014
    %v1078 = vpack.c.b16 %v1018, %v1015
    %v1079 = vpack.c.b16 %v1019, %v1016
    %v1080 = vpack.c.b16 %v1023, %v1020
    %v1081 = vpack.c.b16 %v1024, %v1021
    %v1082 = vpack.c.b16 %v1025, %v1022
    %v1083 = vpack.c.b16 %v1029, %v1026
    %v1084 = vpack.c.b16 %v1030, %v1027
    %v1085 = vpack.c.b16 %v1031, %v1028
    %v1086 = vpack.c.b16 %v1035, %v1032
    %v1087 = vpack.c.b16 %v1036, %v1033
    %v1088 = vpack.c.b16 %v1037, %v1034
    %v1089 = vpack.c.b16 %v1041, %v1038
    %v1090 = vpack.c.b16 %v1042, %v1039
    %v1091 = vpack.c.b16 %v1043, %v1040
    %1140 = vmatprep.subr.bf16.mxu0 %v1045
    %1141 = vmatpush1.bf16.msra.mxu0 %v1044
    %1142 = vmatprep.subr.bf16.mxu0 %v1048
    %1143 = vmatpush1.bf16.msra.mxu0 %v1047
    %1144 = vmatprep.subr.bf16.mxu0 %v1051
    %1145 = vmatpush1.bf16.msra.mxu0 %v1050
    %1146 = vmatprep.subr.bf16.mxu0 %v1054
    %1147 = vmatpush1.bf16.msra.mxu0 %v1053
    %1148 = vmatprep.subr.bf16.mxu0 %v1057
    %1149 = vmatpush1.bf16.msra.mxu0 %v1056
    %1150 = vmatprep.subr.bf16.mxu0 %v1060
    %1151 = vmatpush1.bf16.msra.mxu0 %v1059
    %1152 = vmatprep.subr.bf16.mxu0 %v1063
    %1153 = vmatpush1.bf16.msra.mxu0 %v1062
    %1154 = vmatprep.subr.bf16.mxu0 %v1066
    %1155 = vmatpush1.bf16.msra.mxu0 %v1065
    %1156 = vmatprep.subr.bf16.mxu0 %v1069
    %1157 = vmatpush1.bf16.msra.mxu0 %v1068
    %1158 = vmatprep.subr.bf16.mxu0 %v1072
    %1159 = vmatpush1.bf16.msra.mxu0 %v1071
    %1160 = vmatprep.subr.bf16.mxu0 %v1075
    %1161 = vmatpush1.bf16.msra.mxu0 %v1074
    %1162 = vmatprep.subr.bf16.mxu0 %v1078
    %1163 = vmatpush1.bf16.msra.mxu0 %v1077
    %1164 = vmatprep.subr.bf16.mxu0 %v1081
    %1165 = vmatpush1.bf16.msra.mxu0 %v1080
    %1166 = vmatprep.subr.bf16.mxu0 %v1084
    %1167 = vmatpush1.bf16.msra.mxu0 %v1083
    %1168 = vmatprep.subr.bf16.mxu0 %v1087
    %1169 = vmatpush1.bf16.msra.mxu0 %v1086
    %1170 = vmatprep.subr.bf16.mxu0 %v1090
    %1171 = vmatpush1.bf16.msra.mxu0 %v1089
    %1172 = vmatprep.mubr.bf16.mxu0 %v819
    %1173 = vmatmul.mubr.bf16.gmra.mrb[0].mxu0 %v818
    %v1174 = vpop.f32.mrb[0].mxu0
    %v1175 = vadd.f32 0.0, %v1174
    %v1176 = vpop.f32.mrb[0].mxu0
    %v1177 = vadd.f32 0.0, %v1176
    %v1178 = vpop.f32.mrb[0].mxu0
    %v1179 = vpop.f32.mrb[0].mxu0
    %1180 = vdwg.mxu0
    %1181 = vmatprep.subr.bf16.mxu0 0
    %1182 = vmatpush1.bf16.msra.mxu0 %v1046
    %1183 = vmatprep.subr.bf16.mxu0 0
    %1184 = vmatpush1.bf16.msra.mxu0 %v1049
    %1185 = vmatprep.subr.bf16.mxu0 0
    %1186 = vmatpush1.bf16.msra.mxu0 %v1052
    %1187 = vmatprep.subr.bf16.mxu0 0
    %1188 = vmatpush1.bf16.msra.mxu0 %v1055
    %1189 = vmatprep.subr.bf16.mxu0 0
    %1190 = vmatpush1.bf16.msra.mxu0 %v1058
    %1191 = vmatprep.subr.bf16.mxu0 0
    %1192 = vmatpush1.bf16.msra.mxu0 %v1061
    %1193 = vmatprep.subr.bf16.mxu0 0
    %1194 = vmatpush1.bf16.msra.mxu0 %v1064
    %1195 = vmatprep.subr.bf16.mxu0 0
    %1196 = vmatpush1.bf16.msra.mxu0 %v1067
    %1197 = vmatprep.subr.bf16.mxu0 0
    %1198 = vmatpush1.bf16.msra.mxu0 %v1070
    %1199 = vmatprep.subr.bf16.mxu0 0
    %1200 = vmatpush1.bf16.msra.mxu0 %v1073
    %1201 = vmatprep.subr.bf16.mxu0 0
    %1202 = vmatpush1.bf16.msra.mxu0 %v1076
    %1203 = vmatprep.subr.bf16.mxu0 0
    %1204 = vmatpush1.bf16.msra.mxu0 %v1079
    %1205 = vmatprep.subr.bf16.mxu0 0
    %1206 = vmatpush1.bf16.msra.mxu0 %v1082
    %1207 = vmatprep.subr.bf16.mxu0 0
    %1208 = vmatpush1.bf16.msra.mxu0 %v1085
    %1209 = vmatprep.subr.bf16.mxu0 0
    %1210 = vmatpush1.bf16.msra.mxu0 %v1088
    %1211 = vmatprep.subr.bf16.mxu0 0
    %1212 = vmatpush1.bf16.msra.mxu0 %v1091
    %1213 = vmatprep.mubr.bf16.mxu0 %v819
    %1214 = vmatmul.mubr.bf16.gmra.mrb[0].mxu0 %v818
    %v1215 = vpop.f32.mrb[0].mxu0
    %v1216 = vadd.f32 0.0, %v1215
    %v1217 = vpop.f32.mrb[0].mxu0
    %v1218 = vpop.f32.mrb[0].mxu0
    %v1219 = vpop.f32.mrb[0].mxu0
    %1220 = vdwg.mxu0
    %v1221 = vpack.c.bf16 %v1175, %v1175
    %v1222 = vpack.c.bf16 %v1177, %v1177
    %v1223 = vpack.c.bf16 %v1216, %v1216
    %v1224 = vld [vmem:[%s6] sm:$0x7]
    %v1227 = vunpack.c.l.s4 1966171168
    %v1228 = vunpack.c.0.s8 %v1227
    %v1229 = vlaneseq
    %v1230 = vshrl.u32 %v1229, 7
    %v1231 = vsub.s32 %v1228, %v1230
    %v1232 = vrot.slane %v1224, %v1231
    %v1233 = vcombine.high %v1232, %v1232
    %v1235 = vunpack.c.l.s4 1966171168
    %v1236 = vunpack.c.0.s8 %v1235
    %v1237 = vlaneseq
    %v1238 = vshrl.u32 %v1237, 7
    %v1239 = vsub.s32 %v1236, %v1238
    %v1240 = vrot.slane %v1232, %v1239
    %v1242 = vunpack.c.l.s4 1966171168
    %v1243 = vunpack.c.0.s8 %v1242
    %v1244 = vlaneseq
    %v1245 = vshrl.u32 %v1244, 7
    %v1246 = vsub.s32 %v1243, %v1245
    %v1247 = vrot.slane %v1233, %v1246
    %v1248 = vcombine.high %v1240, %v1240
    %v1250 = vpack.i.b16 %v1240, %v1240
    %v1252 = vlaneseq
    %v1253 = vshrl.u32 %v1252, 7
    %v1254 = vsub.s32 0, %v1253
    %v1255 = vrot.slane %v1250, %v1254
    %v1257 = vpack.i.b16 %v1247, %v1247
    %v1259 = vlaneseq
    %v1260 = vshrl.u32 %v1259, 7
    %v1261 = vsub.s32 0, %v1260
    %v1262 = vrot.slane %v1257, %v1261
    %v1264 = vpack.i.b16 %v1248, %v1248
    %v1266 = vlaneseq
    %v1267 = vshrl.u32 %v1266, 7
    %v1268 = vsub.s32 0, %v1267
    %v1269 = vrot.slane %v1264, %v1268
    %v1270 = vadd.bf16 %v1221, %v1255
    %v1271 = vadd.bf16 %v1222, %v1262
    %v1272 = vadd.bf16 %v1223, %v1269
    %v1273 = vmax.bf16 %v1270, 0
    %v1274 = vmax.bf16 %v1271, 0
    %v1275 = vmax.bf16 %v1272, 0
    %v1276 = vld [vmem:[#allocation11] sm:$0xf]
    %v1277 = vld [vmem:[#allocation11 + $0x4] sm:$0xf]
    %v1278 = vld [vmem:[#allocation11 + $0x8] sm:$0xf]
    %v1279 = vld [vmem:[#allocation11 + $0xc] sm:$0xf]
    %v1280 = vld [vmem:[#allocation11 + $0x10] sm:$0xf]
    %v1281 = vld [vmem:[#allocation11 + $0x14] sm:$0xf]
    %v1282 = vld [vmem:[#allocation11 + $0x18] sm:$0xf]
    %v1283 = vld [vmem:[#allocation11 + $0x1c] sm:$0xf]
    %v1284 = vld [vmem:[#allocation11 + $0x20] sm:$0xf]
    %v1285 = vld [vmem:[#allocation11 + $0x24] sm:$0xf]
    %v1286 = vld [vmem:[#allocation11 + $0x28] sm:$0xf]
    %v1287 = vld [vmem:[#allocation11 + $0x2c] sm:$0xf]
    %v1288 = vld [vmem:[#allocation11 + $0x30] sm:$0xf]
    %v1289 = vld [vmem:[#allocation11 + $0x34] sm:$0xf]
    %v1290 = vld [vmem:[#allocation11 + $0x38] sm:$0xf]
    %v1291 = vld [vmem:[#allocation11 + $0x3c] sm:$0xf]
    %v1292 = vld [vmem:[#allocation11 + $0x40] sm:$0xf]
    %v1293 = vld [vmem:[#allocation11 + $0x44] sm:$0xf]
    %v1294 = vld [vmem:[#allocation11 + $0x48] sm:$0xf]
    %v1295 = vld [vmem:[#allocation11 + $0x4c] sm:$0xf]
    %v1296 = vld [vmem:[#allocation11 + $0x50] sm:$0xf]
    %v1297 = vld [vmem:[#allocation11 + $0x54] sm:$0xf]
    %v1298 = vld [vmem:[#allocation11 + $0x58] sm:$0xf]
    %v1299 = vld [vmem:[#allocation11 + $0x5c] sm:$0xf]
    %v1300 = vld [vmem:[#allocation11 + $0x60] sm:$0xf]
    %v1301 = vld [vmem:[#allocation11 + $0x64] sm:$0xf]
    %v1302 = vld [vmem:[#allocation11 + $0x68] sm:$0xf]
    %v1303 = vld [vmem:[#allocation11 + $0x6c] sm:$0xf]
    %v1304 = vld [vmem:[#allocation11 + $0x70] sm:$0xf]
    %v1305 = vld [vmem:[#allocation11 + $0x74] sm:$0xf]
    %v1306 = vld [vmem:[#allocation11 + $0x78] sm:$0xf]
    %v1307 = vld [vmem:[#allocation11 + $0x7c] sm:$0xf]
    %v1308 = vld [vmem:[%s8] sm:$0x1]
    %v1310 = vlaneseq
    %v1311 = vshrl.u32 %v1310, 7
    %v1312 = vsub.s32 0, %v1311
    %v1313 = vrot.slane %v1308, %v1312
    %v1347 = vunpack.c.l.b16 %v1276
    %v1348 = vunpack.c.l.b16 %v1277
    %v1349 = vunpack.c.l.b16 %v1278
    %v1350 = vunpack.c.l.b16 %v1279
    %v1351 = vunpack.c.l.b16 %v1280
    %v1352 = vunpack.c.l.b16 %v1281
    %v1353 = vunpack.c.l.b16 %v1282
    %v1354 = vunpack.c.l.b16 %v1283
    %v1355 = vunpack.c.l.b16 %v1284
    %v1356 = vunpack.c.l.b16 %v1285
    %v1357 = vunpack.c.l.b16 %v1286
    %v1358 = vunpack.c.l.b16 %v1287
    %v1359 = vunpack.c.l.b16 %v1288
    %v1360 = vunpack.c.l.b16 %v1289
    %v1361 = vunpack.c.l.b16 %v1290
    %v1362 = vunpack.c.l.b16 %v1291
    %v1363 = vunpack.c.l.b16 %v1292
    %v1364 = vunpack.c.l.b16 %v1293
    %v1365 = vunpack.c.l.b16 %v1294
    %v1366 = vunpack.c.l.b16 %v1295
    %v1367 = vunpack.c.l.b16 %v1296
    %v1368 = vunpack.c.l.b16 %v1297
    %v1369 = vunpack.c.l.b16 %v1298
    %v1370 = vunpack.c.l.b16 %v1299
    %v1371 = vunpack.c.l.b16 %v1300
    %v1372 = vunpack.c.l.b16 %v1301
    %v1373 = vunpack.c.l.b16 %v1302
    %v1374 = vunpack.c.l.b16 %v1303
    %v1375 = vunpack.c.l.b16 %v1304
    %v1376 = vunpack.c.l.b16 %v1305
    %v1377 = vunpack.c.l.b16 %v1306
    %v1378 = vunpack.c.l.b16 %v1307
    %v1379 = vpack.c.b16 %v1348, %v1347
    %v1380 = vpack.c.b16 %v1350, %v1349
    %v1381 = vpack.c.b16 %v1352, %v1351
    %v1382 = vpack.c.b16 %v1354, %v1353
    %v1383 = vpack.c.b16 %v1356, %v1355
    %v1384 = vpack.c.b16 %v1358, %v1357
    %v1385 = vpack.c.b16 %v1360, %v1359
    %v1386 = vpack.c.b16 %v1362, %v1361
    %v1387 = vpack.c.b16 %v1364, %v1363
    %v1388 = vpack.c.b16 %v1366, %v1365
    %v1389 = vpack.c.b16 %v1368, %v1367
    %v1390 = vpack.c.b16 %v1370, %v1369
    %v1391 = vpack.c.b16 %v1372, %v1371
    %v1392 = vpack.c.b16 %v1374, %v1373
    %v1393 = vpack.c.b16 %v1376, %v1375
    %v1394 = vpack.c.b16 %v1378, %v1377
    %1411 = vmatprep.subr.bf16.mxu0 0
    %1412 = vmatpush1.bf16.msra.mxu0 %v1379
    %1413 = vmatprep.subr.bf16.mxu0 0
    %1414 = vmatpush1.bf16.msra.mxu0 %v1380
    %1415 = vmatprep.subr.bf16.mxu0 0
    %1416 = vmatpush1.bf16.msra.mxu0 %v1381
    %1417 = vmatprep.subr.bf16.mxu0 0
    %1418 = vmatpush1.bf16.msra.mxu0 %v1382
    %1419 = vmatprep.subr.bf16.mxu0 0
    %1420 = vmatpush1.bf16.msra.mxu0 %v1383
    %1421 = vmatprep.subr.bf16.mxu0 0
    %1422 = vmatpush1.bf16.msra.mxu0 %v1384
    %1423 = vmatprep.subr.bf16.mxu0 0
    %1424 = vmatpush1.bf16.msra.mxu0 %v1385
    %1425 = vmatprep.subr.bf16.mxu0 0
    %1426 = vmatpush1.bf16.msra.mxu0 %v1386
    %1427 = vmatprep.subr.bf16.mxu0 0
    %1428 = vmatpush1.bf16.msra.mxu0 %v1387
    %1429 = vmatprep.subr.bf16.mxu0 0
    %1430 = vmatpush1.bf16.msra.mxu0 %v1388
    %1431 = vmatprep.subr.bf16.mxu0 0
    %1432 = vmatpush1.bf16.msra.mxu0 %v1389
    %1433 = vmatprep.subr.bf16.mxu0 0
    %1434 = vmatpush1.bf16.msra.mxu0 %v1390
    %1435 = vmatprep.subr.bf16.mxu0 0
    %1436 = vmatpush1.bf16.msra.mxu0 %v1391
    %1437 = vmatprep.subr.bf16.mxu0 0
    %1438 = vmatpush1.bf16.msra.mxu0 %v1392
    %1439 = vmatprep.subr.bf16.mxu0 0
    %1440 = vmatpush1.bf16.msra.mxu0 %v1393
    %1441 = vmatprep.subr.bf16.mxu0 0
    %1442 = vmatpush1.bf16.msra.mxu0 %v1394
    %1443 = vmatprep.mubr.bf16.mxu0 %v1274
    %1444 = vmatmul.mubr.bf16.gmra.mrb[0].mxu0 %v1273
    %v1445 = vpop.f32.mrb[0].mxu0
    %v1446 = vadd.f32 %v1313, %v1445
    %v1447 = vpop.f32.mrb[0].mxu0
    %v1448 = vpop.f32.mrb[0].mxu0
    %v1449 = vpop.f32.mrb[0].mxu0
    %1450 = vdwg.mxu0
    %v1451 = vmax.f32 %v1446, 0.0
    %v1452 = vunpack.c.l.bf16 %v1275
    %v1453 = vld [vmem:[%s9] sm:$0x1]
    %v1455 = vlaneseq
    %v1456 = vshrl.u32 %v1455, 7
    %v1457 = vsub.s32 0, %v1456
    %v1458 = vrot.slane %v1453, %v1457
    %v1460 = vmul.f32 %v1452, %v1458
    %1461 = vadd.xlane.f32.xlu0 %v1460
    %v1462 = vpop.xlane.xlu0 %1461
    %v1463 = vld [vmem:[#allocation2] sm:$0x1]
    %v1465 = vlaneseq
    %v1466 = vshrl.u32 %v1465, 7
    %v1467 = vsub.s32 0, %v1466
    %v1468 = vrot.slane %v1463, %v1467
    %v1470 = vadd.f32 %v1462, %v1468
    %v1471 = vmax.f32 %v1470, 0.0
    %v1472 = vlaneseq
    %v1473 = vshrl.u32 %v1472, 7
    %vm1474 = vcmp.lt.s32.totalorder %v1473, 8
    %v1475 = vsel %vm1474, 1, 0
    %vm1476 = vcmp.eq.s32.totalorder %v1475, 1
    %v1477 = vsel %vm1476, %v1451, 0.0
    %1478 = vadd.xlane.f32.xlu0 %v1477
    %v1479 = vpop.xlane.xlu0 %1478
    %v1480 = vrot.slane %v1479, 4
    %v1481 = vadd.f32 %v1479, %v1480
    %v1482 = vrot.slane %v1481, 2
    %v1483 = vadd.f32 %v1481, %v1482
    %v1484 = vrot.slane %v1483, 1
    %v1485 = vadd.f32 %v1483, %v1484
    %s1486 = vtos %v1485
    %s1487 = smul.f32 %s1486, 0.0078125
    %v1488 = vstv %s1487
    %v1489 = vsub.f32 %v1451, %v1488
    %1491 = vset.pattern.permute.xlu0 0
    %1492 = vperm.xlu0 %1491, %v1471
    %v1493 = vpop.permute.xlu0 %1492
    %v1495 = vadd.f32 %v1493, %v1489
    %1496 = vst [vmem:[#allocation12] sm:$0xff] %v1495
    // Predicated region
    $region66: #{dnn_forward.1} parent=1 // pred_check
      _
    $region67: #{dnn_forward.1} parent=1 // pred_check_branch
      %1498 = sbr.rel (0) target = $region69
    $region68: #{dnn_forward.1} parent=1 // pred_region
      %s1500 = ssub.s32 128, 128
      %1501 = vsyncadd [#allocation5], %s1500
      %s1503 = sshll.u32 [#allocation12], 4
      %s1504 = int_to_ptr.vmem [resolvable:$true] %s1503
      %1506 = dma.vmem_to_hbm [thread:$0]  %s1504, 128, %s11, [#allocation5]
    $region69: #{dnn_forward.1} parent=1 // pred_fallthru
      _
    // Predicated region
    $region70: #{dnn_forward.1} parent=1 // pred_check
      _
    $region71: #{dnn_forward.1} parent=1 // pred_check_branch
      %1508 = sbr.rel (0) target = $region73
    $region72: #{dnn_forward.1} parent=1 // pred_region
      %1509 = dma.done [#allocation5], 128
    $region73: #{dnn_forward.1} parent=1 // pred_fallthru
      _
    %1510 = vsyncpa [#allocation4], 1
    %1511 = vsyncpa [#allocation7], 1
    %1512 = vsyncpa [#allocation10], 1
    %1513 = vsyncpa [#allocation5], 1

</llo_original>
